<compile_context>
chip_gen: v7x
topology: tpu7x:2x2x1
jax: 0.10.0
libtpu: 0.0.40
codegen_flags: <defaults>
</compile_context>

<pallas_src>
import math

import jax
import jax.numpy as jnp
from jax import lax
from jax.experimental import pallas as pl
from jax.experimental.pallas import tpu as pltpu


def _round_up(x, m):
    return ((x + m - 1) // m) * m


def _row_dim_semantics(num_blocks):
    # v7x has 2 TensorCores; only CORE_PARALLEL guarantees cross-core sharding
    # of the row axis.  Other generations keep the portable string.
    try:
        kind = jax.devices()[0].device_kind.lower()
    except Exception:
        kind = ""
    if num_blocks > 1 and ("v7" in kind or "7x" in kind) and hasattr(pltpu, "CORE_PARALLEL"):
        return (pltpu.CORE_PARALLEL,)
    return ("parallel",)


# --------------------------------------------------------------------------
# Pallas kernel factory: masked char-LSTM + gate mix for one (TM, D) block.
# --------------------------------------------------------------------------
def _make_wc_gate_kernel(C, D, TM, TR, F):
    G = TR // F            # folded rows produced per sub-tile (multiple of 8 when F > 1)
    nsub = TM // TR
    four_d = 4 * D

    def kernel(char_ref, word_ref, lens_ref,
               wih_ref, whh_ref, b_ref,
               w1_ref, b1_ref, w2_ref, b2_ref,
               out_ref, gx_scr):
        # char_ref: (C, TM, D) bf16   time-major char embeddings for TM words
        # word_ref: (TM, D)    f32    word embeddings
        # lens_ref: (TM, 1)    int32  per-word char lengths (already clamped >= 1)
        # gx_scr  : (C, TM, 4D) f32   hoisted input-projection scratch

        # ---- hoisted input projection: one big MXU matmul over all timesteps ----
        x_all = char_ref[...].reshape(C * TM, D)              # layout-free (TM % 16 == 0)
        gx = jnp.dot(x_all, wih_ref[...], preferred_element_type=jnp.float32)
        gx_scr[...] = (gx + b_ref[...]).reshape(C, TM, four_d)

        whh = whh_ref[...]          # (D, 4D) bf16 recurrent weight (review: bf16 MXU operands)
        w1 = w1_ref[...]
        b1 = b1_ref[...]
        w2 = w2_ref[...]
        b2 = b2_ref[...]

        def process(r):
            # r is a Python int on the static (single sub-tile) path, traced otherwise
            if isinstance(r, int):
                row0 = r * TR
                out0 = r * G
            else:
                row0 = pl.multiple_of(r * TR, TR)
                out0 = pl.multiple_of(r * G, G)

            lens = lens_ref[pl.ds(row0, TR), :]               # (TR, 1) int32

            def step(t, carry):
                h, c = carry
                # only h @ W_hh remains on the serial path; bf16 operands, f32 acc
                gates = gx_scr[t, pl.ds(row0, TR), :] + jnp.dot(
                    h.astype(jnp.bfloat16), whh,
                    preferred_element_type=jnp.float32)       # (TR, 4D) f32
                act = jax.nn.sigmoid(gates)                   # one lane-dense EUP pass
                i_g = act[:, 0:D]                             # PyTorch gate order i,f,g,o
                f_g = act[:, D:2 * D]
                o_g = act[:, 3 * D:four_d]
                g_g = jnp.tanh(gates[:, 2 * D:3 * D])
                c_new = f_g * c + i_g * g_g
                h_new = o_g * jnp.tanh(c_new)
                valid = lens > t                              # (TR, 1), broadcasts over D
                return (jnp.where(valid, h_new, h), jnp.where(valid, c_new, c))

            h0 = jnp.zeros((TR, D), jnp.float32)
            c0 = jnp.zeros((TR, D), jnp.float32)
            h, _ = lax.fori_loop(0, C, step, (h0, c0), unroll=True)

            # ---- gate(s1 = last LSTM hidden, s2 = word embedding) ----
            s1 = h
            s2 = word_ref[pl.ds(row0, TR), :]
            z1 = jnp.dot(s1, w1, preferred_element_type=jnp.float32) + b1
            z2 = jnp.dot(s2, w2, preferred_element_type=jnp.float32) + b2
            mx = jnp.maximum(z1, z2)
            e1 = jnp.exp(z1 - mx)
            e2 = jnp.exp(z2 - mx)
            sm1 = e2 * pl.reciprocal(e1 + e2, approx=True)    # softmax(z1, z2)[1] on the EUP
            mixed = sm1 * s1 + z2 * s2    # z2 stays the raw linear output (reference bug)

            if F == 1:
                out_ref[pl.ds(row0, TR), :] = mixed
            else:
                # lane-dense pack: F contiguous row chunks of D lanes -> 128 lanes
                folded = jnp.concatenate(
                    [mixed[k * G:(k + 1) * G, :] for k in range(F)], axis=1)
                out_ref[pl.ds(out0, G), :] = folded

        if nsub == 1:
            process(0)                                        # fully static path
        else:
            def subtile_body(r, carry):
                process(r)
                return carry
            lax.fori_loop(0, nsub, subtile_body, 0)           # scf.for bounds live ranges

    return kernel


# --------------------------------------------------------------------------
# pallas_call wrapper for the gated word embedding.
# --------------------------------------------------------------------------
def gated_word_embed_pallas(char_emb_tm, word_emb, lens2d, params, tm, tr, fold):
    C, M_pad, D = char_emb_tm.shape
    TM, TR, F = tm, tr, fold
    G = TR // F
    nsub = TM // TR
    num_blocks = M_pad // TM

    wih_t = params["wih"].T.astype(jnp.bfloat16)              # (D, 4D) bf16 matmul operand
    whh_t = params["whh"].T.astype(jnp.bfloat16)              # (D, 4D) bf16 recurrent weight
    bias = (params["b_ih"] + params["b_hh"]).reshape(1, 4 * D).astype(jnp.float32)
    w1_t = params["w1"].T.astype(jnp.float32)
    b1 = params["b1"].reshape(1, D).astype(jnp.float32)
    w2_t = params["w2"].T.astype(jnp.float32)
    b2 = params["b2"].reshape(1, D).astype(jnp.float32)

    out_cols = 128 if F > 1 else D
    out_shape = jax.ShapeDtypeStruct((M_pad // F, out_cols), jnp.float32)

    grid_spec = pltpu.PrefetchScalarGridSpec(
        num_scalar_prefetch=0,
        grid=(num_blocks,),
        in_specs=[
            pl.BlockSpec((C, TM, D), lambda i: (0, i, 0)),    # char embeddings (bf16, time-major)
            pl.BlockSpec((TM, D), lambda i: (i, 0)),          # word embeddings (f32)
            pl.BlockSpec((TM, 1), lambda i: (i, 0)),          # char lengths (int32)
            pl.BlockSpec((D, 4 * D), lambda i: (0, 0)),       # W_ih^T (bf16)
            pl.BlockSpec((D, 4 * D), lambda i: (0, 0)),       # W_hh^T (bf16)
            pl.BlockSpec((1, 4 * D), lambda i: (0, 0)),       # LSTM bias (f32)
            pl.BlockSpec((D, D), lambda i: (0, 0)),           # W1^T
            pl.BlockSpec((1, D), lambda i: (0, 0)),           # b1
            pl.BlockSpec((D, D), lambda i: (0, 0)),           # W2^T
            pl.BlockSpec((1, D), lambda i: (0, 0)),           # b2
        ],
        out_specs=pl.BlockSpec((TM // F, out_cols), lambda i: (i, 0)),
        scratch_shapes=[pltpu.VMEM((C, TM, 4 * D), jnp.float32)],
    )

    # VMEM budget (review): double-buffered in/out blocks + gx scratch + weights.
    need = (2 * (C * TM * D * 2 + TM * D * 4 + TM * 4 + TM * D * 4)
            + C * TM * 4 * D * 4
            + 2 * (2 * D * 4 * D * 2 + 4 * D * 4 + 2 * D * D * 4 + 2 * D * 4))
    vmem_limit = int(min(max(2 * need, 32 * 1024 * 1024), 64 * 1024 * 1024))

    out = pl.pallas_call(
        _make_wc_gate_kernel(C, D, TM, TR, F),
        out_shape=out_shape,
        grid_spec=grid_spec,
        compiler_params=pltpu.CompilerParams(
            dimension_semantics=_row_dim_semantics(num_blocks),
            vmem_limit_bytes=vmem_limit),
    )(char_emb_tm, word_emb, lens2d, wih_t, whh_t, bias, w1_t, b1, w2_t, b2)

    if F > 1:
        # invert the in-kernel (block, sub-tile, chunk) lane packing on the host
        out = (out.reshape(num_blocks, nsub, G, F, D)
                  .transpose(0, 1, 3, 2, 4)
                  .reshape(M_pad, D))
    return out


# --------------------------------------------------------------------------
# Forward pass matching WordCharEmbedding.forward -> (gated_word_embed, aspect_embed)
# --------------------------------------------------------------------------
def word_char_embedding(word_indices, word_char_indices, aspect_char_indices, params,
                        row_tile=512):
    B, S, C = word_char_indices.shape
    D = params["word_table"].shape[1]
    M = B * S

    # flattened word indices, time-major char indices, per-word char lengths
    word_idx = word_indices.reshape(M).astype(jnp.int32)
    idx_tm = jnp.transpose(word_char_indices, (2, 0, 1)).reshape(C, M).astype(jnp.int32)
    lens = jnp.maximum(jnp.sum(word_char_indices != 0, axis=-1).reshape(M), 1).astype(jnp.int32)

    # row tile: multiple of 16 keeps bf16 in-kernel reshapes layout-free; shrinks
    # to round_up(M, 16) for small batches so padding waste is at most one block.
    TM = min(_round_up(max(row_tile, 16), 16), _round_up(M, 16))
    M_pad = _round_up(M, TM)

    # pad the SMALL int32 index arrays (essentially free) instead of the gathered
    # (C, M, D) embedding tensor (review: avoids a full extra HBM copy).
    if M_pad != M:
        pad = M_pad - M
        word_idx = jnp.pad(word_idx, (0, pad))
        idx_tm = jnp.pad(idx_tm, ((0, 0), (0, pad)))
        lens = jnp.pad(lens, (0, pad), constant_values=1)

    # gathers happen after padding; char embeddings stream as bf16 matmul operands
    word_emb = jnp.take(params["word_table"], word_idx, axis=0).astype(jnp.float32)
    char_emb_tm = jnp.take(params["char_table"], idx_tm, axis=0).astype(jnp.bfloat16)

    # recurrence sub-tile (vreg-resident carries) and lane-dense output fold
    TR = math.gcd(TM, 64)
    F = 1
    if D < 128 and 128 % D == 0 and TR % (8 * (128 // D)) == 0:
        F = 128 // D

    gated = gated_word_embed_pallas(char_emb_tm, word_emb, lens[:, None], params,
                                    TM, TR, F)
    gated = gated[:M].reshape(B, S, D)

    aspect_embed = jnp.take(params["char_table"], aspect_char_indices, axis=0)  # (B, A, D)
    return gated, aspect_embed


# --------------------------------------------------------------------------
# Pure-JAX reference (mirrors the kernel's bf16 rounding of MXU operands).
# --------------------------------------------------------------------------
def _reference_forward(word_indices, word_char_indices, aspect_char_indices, params):
    B, S, C = word_char_indices.shape
    D = params["word_table"].shape[1]
    M = B * S

    word_emb = jnp.take(params["word_table"], word_indices.reshape(M), axis=0).astype(jnp.float32)
    char_emb = jnp.take(params["char_table"], word_char_indices, axis=0)
    char_emb = char_emb.astype(jnp.bfloat16).astype(jnp.float32).reshape(M, C, D)
    lens = jnp.maximum(jnp.sum(word_char_indices != 0, axis=-1).reshape(M), 1)

    wih = params["wih"].astype(jnp.bfloat16).astype(jnp.float32)
    whh = params["whh"].astype(jnp.bfloat16).astype(jnp.float32)
    b = (params["b_ih"] + params["b_hh"]).astype(jnp.float32)

    def cell(carry, inp):
        h, c = carry
        x_t, t = inp
        h_mm = h.astype(jnp.bfloat16).astype(jnp.float32)
        gates = x_t @ wih.T + h_mm @ whh.T + b
        i_g = jax.nn.sigmoid(gates[:, 0:D])
        f_g = jax.nn.sigmoid(gates[:, D:2 * D])
        g_g = jnp.tanh(gates[:, 2 * D:3 * D])
        o_g = jax.nn.sigmoid(gates[:, 3 * D:4 * D])
        c_new = f_g * c + i_g * g_g
        h_new = o_g * jnp.tanh(c_new)
        m = (lens > t)[:, None]
        return (jnp.where(m, h_new, h), jnp.where(m, c_new, c)), None

    h0 = jnp.zeros((M, D), jnp.float32)
    (h, _), _ = lax.scan(cell, (h0, h0),
                         (jnp.transpose(char_emb, (1, 0, 2)), jnp.arange(C)))
    s1, s2 = h, word_emb
    z1 = s1 @ params["w1"].T + params["b1"]
    z2 = s2 @ params["w2"].T + params["b2"]
    mx = jnp.maximum(z1, z2)
    e1, e2 = jnp.exp(z1 - mx), jnp.exp(z2 - mx)
    out = (e2 / (e1 + e2)) * s1 + z2 * s2
    return out.reshape(B, S, D), jnp.take(params["char_table"], aspect_char_indices, axis=0)


def make_params(key, word_vocab, char_vocab, D):
    ks = jax.random.split(key, 10)
    scale = 0.1
    return {
        "word_table": scale * jax.random.normal(ks[0], (word_vocab, D), jnp.float32),
        "char_table": scale * jax.random.normal(ks[1], (char_vocab, D), jnp.float32),
        "wih": scale * jax.random.normal(ks[2], (4 * D, D), jnp.float32),
        "whh": scale * jax.random.normal(ks[3], (4 * D, D), jnp.float32),
        "b_ih": scale * jax.random.normal(ks[4], (4 * D,), jnp.float32),
        "b_hh": scale * jax.random.normal(ks[5], (4 * D,), jnp.float32),
        "w1": scale * jax.random.normal(ks[6], (D, D), jnp.float32),
        "b1": scale * jax.random.normal(ks[7], (D,), jnp.float32),
        "w2": scale * jax.random.normal(ks[8], (D, D), jnp.float32),
        "b2": scale * jax.random.normal(ks[9], (D,), jnp.float32),
    }


def _run_case(key, B, S, C, A, D, Vw, Vc, params, row_tile):
    k1, k2, k3, k4 = jax.random.split(key, 4)
    word_indices = jax.random.randint(k1, (B, S), 1, Vw, dtype=jnp.int32)
    # padded char indices with a contiguous valid prefix (0 = pad); allow length 0
    char_lens = jax.random.randint(k2, (B, S), 0, C + 1, dtype=jnp.int32)
    raw_chars = jax.random.randint(k3, (B, S, C), 1, Vc, dtype=jnp.int32)
    pos = jnp.arange(C, dtype=jnp.int32)
    word_char_indices = jnp.where(pos[None, None, :] < char_lens[:, :, None], raw_chars, 0)
    aspect_char_indices = jax.random.randint(k4, (B, A), 1, Vc, dtype=jnp.int32)

    gated, aspect = word_char_embedding(word_indices, word_char_indices,
                                        aspect_char_indices, params, row_tile=row_tile)
    jax.block_until_ready((gated, aspect))
    assert gated.shape == (B, S, D)
    assert aspect.shape == (B, A, D)

    ref_gated, ref_aspect = _reference_forward(word_indices, word_char_indices,
                                               aspect_char_indices, params)
    assert jnp.allclose(gated, ref_gated, atol=1e-2, rtol=1e-2), "gated mismatch"
    assert jnp.allclose(aspect, ref_aspect, atol=1e-6), "aspect mismatch"


if __name__ == "__main__":
    D = 32                         # embed_dim
    Vw, Vc = 50, 30
    key = jax.random.PRNGKey(0)
    kp, ka, kb = jax.random.split(key, 3)
    params = make_params(kp, Vw, Vc, D)

    # Case 1: module-scale demo (single block, static sub-tile path, F=1).
    _run_case(ka, B=2, S=8, C=8, A=8, D=D, Vw=Vw, Vc=Vc, params=params, row_tile=512)
    # Case 2: exercises multi-block grid, index-array padding, the in-kernel
    # sub-tile loop and the lane-dense output fold (TM=128, TR=64, F=4).
    _run_case(kb, B=4, S=63, C=8, A=8, D=D, Vw=Vw, Vc=Vc, params=params, row_tile=128)

    print("KERNEL_OK")
</pallas_src>

<mosaic_0001>
module attributes {stable_mosaic.version = 11 : i64} {
  func.func @kernel(%arg0: i32, %arg1: memref<8x16x32xbf16, #tpu.memory_space<vmem>>, %arg2: memref<16x32xf32, #tpu.memory_space<vmem>>, %arg3: memref<16x1xi32, #tpu.memory_space<vmem>>, %arg4: memref<32x128xbf16, #tpu.memory_space<vmem>>, %arg5: memref<32x128xbf16, #tpu.memory_space<vmem>>, %arg6: memref<1x128xf32, #tpu.memory_space<vmem>>, %arg7: memref<32x32xf32, #tpu.memory_space<vmem>>, %arg8: memref<1x32xf32, #tpu.memory_space<vmem>>, %arg9: memref<32x32xf32, #tpu.memory_space<vmem>>, %arg10: memref<1x32xf32, #tpu.memory_space<vmem>>, %arg11: memref<16x32xf32, #tpu.memory_space<vmem>>, %arg12: memref<8x16x128xf32, #tpu.memory_space<vmem>>) attributes {dimension_semantics = [#tpu.dimension_semantics<parallel>], iteration_bounds = array<i64: 1>, scalar_prefetch = 0 : i64, scratch_operands = 1 : i64, tpu.core_type = #tpu.core_type<tc>, window_params = [{transform_indices = @transform_0, window_bounds = array<i64: 8, 16, 32>}, {transform_indices = @transform_1, window_bounds = array<i64: 16, 32>}, {transform_indices = @transform_2, window_bounds = array<i64: 16, 1>}, {pipeline_mode = #tpu.pipeline_mode<synchronous>, transform_indices = @transform_3, window_bounds = array<i64: 32, 128>}, {pipeline_mode = #tpu.pipeline_mode<synchronous>, transform_indices = @transform_4, window_bounds = array<i64: 32, 128>}, {pipeline_mode = #tpu.pipeline_mode<synchronous>, transform_indices = @transform_5, window_bounds = array<i64: 1, 128>}, {pipeline_mode = #tpu.pipeline_mode<synchronous>, transform_indices = @transform_6, window_bounds = array<i64: 32, 32>}, {pipeline_mode = #tpu.pipeline_mode<synchronous>, transform_indices = @transform_7, window_bounds = array<i64: 1, 32>}, {pipeline_mode = #tpu.pipeline_mode<synchronous>, transform_indices = @transform_8, window_bounds = array<i64: 32, 32>}, {pipeline_mode = #tpu.pipeline_mode<synchronous>, transform_indices = @transform_9, window_bounds = array<i64: 1, 32>}, {transform_indices = @transform_10, window_bounds = array<i64: 16, 32>}]} {
    %c0 = arith.constant 0 : index
    %c0_0 = arith.constant 0 : index
    %c0_1 = arith.constant 0 : index
    %0 = vector.load %arg1[%c0, %c0_0, %c0_1] : memref<8x16x32xbf16, #tpu.memory_space<vmem>>, vector<8x16x32xbf16>
    %1 = vector.shape_cast %0 : vector<8x16x32xbf16> to vector<128x32xbf16>
    %c0_2 = arith.constant 0 : index
    %c0_3 = arith.constant 0 : index
    %2 = vector.load %arg4[%c0_2, %c0_3] : memref<32x128xbf16, #tpu.memory_space<vmem>>, vector<32x128xbf16>
    %cst = arith.constant dense<0.000000e+00> : vector<128x128xf32>
    %3 = tpu.matmul %1, %2, %cst {dimension_numbers = #tpu.dot_dimension_numbers<[1], [0], [0], [1], [0, 0, 1, 1], [], []>} : vector<128x32xbf16>, vector<32x128xbf16>, vector<128x128xf32> -> vector<128x128xf32>
    %c0_4 = arith.constant 0 : index
    %c0_5 = arith.constant 0 : index
    %4 = vector.load %arg6[%c0_4, %c0_5] : memref<1x128xf32, #tpu.memory_space<vmem>>, vector<1x128xf32>
    %5 = vector.broadcast %4 : vector<1x128xf32> to vector<128x128xf32>
    %6 = arith.addf %3, %5 : vector<128x128xf32>
    %7 = vector.shape_cast %6 : vector<128x128xf32> to vector<8x16x128xf32>
    %c0_6 = arith.constant 0 : index
    %c0_7 = arith.constant 0 : index
    %c0_8 = arith.constant 0 : index
    %8 = vector.load %arg12[%c0_6, %c0_7, %c0_8] : memref<8x16x128xf32, #tpu.memory_space<vmem>>, vector<8x16x128xf32>
    tpu.vector_store %arg12[%c0_6, %c0_7, %c0_8], %7 {strides = array<i32>} : memref<8x16x128xf32, #tpu.memory_space<vmem>>, vector<8x16x128xf32>,
    %c0_9 = arith.constant 0 : index
    %c0_10 = arith.constant 0 : index
    %9 = vector.load %arg5[%c0_9, %c0_10] : memref<32x128xbf16, #tpu.memory_space<vmem>>, vector<32x128xbf16>
    %c0_11 = arith.constant 0 : index
    %c0_12 = arith.constant 0 : index
    %10 = vector.load %arg7[%c0_11, %c0_12] : memref<32x32xf32, #tpu.memory_space<vmem>>, vector<32x32xf32>
    %c0_13 = arith.constant 0 : index
    %c0_14 = arith.constant 0 : index
    %11 = vector.load %arg8[%c0_13, %c0_14] : memref<1x32xf32, #tpu.memory_space<vmem>>, vector<1x32xf32>
    %c0_15 = arith.constant 0 : index
    %c0_16 = arith.constant 0 : index
    %12 = vector.load %arg9[%c0_15, %c0_16] : memref<32x32xf32, #tpu.memory_space<vmem>>, vector<32x32xf32>
    %c0_17 = arith.constant 0 : index
    %c0_18 = arith.constant 0 : index
    %13 = vector.load %arg10[%c0_17, %c0_18] : memref<1x32xf32, #tpu.memory_space<vmem>>, vector<1x32xf32>
    %c0_19 = arith.constant 0 : index
    %c0_20 = arith.constant 0 : index
    %14 = vector.load %arg3[%c0_19, %c0_20] : memref<16x1xi32, #tpu.memory_space<vmem>>, vector<16x1xi32>
    %cst_21 = arith.constant 0.000000e+00 : f32
    %15 = vector.broadcast %cst_21 : f32 to vector<16x32xf32>
    %cst_22 = arith.constant 0.000000e+00 : f32
    %16 = vector.broadcast %cst_22 : f32 to vector<16x32xf32>
    %c0_i32 = arith.constant 0 : i32
    %17 = arith.index_cast %c0_i32 : i32 to index
    %c0_23 = arith.constant 0 : index
    %c0_24 = arith.constant 0 : index
    %18 = vector.load %arg12[%17, %c0_23, %c0_24] : memref<8x16x128xf32, #tpu.memory_space<vmem>>, vector<1x16x128xf32>
    %19 = vector.shape_cast %18 : vector<1x16x128xf32> to vector<16x128xf32>
    %20 = arith.truncf %15 : vector<16x32xf32> to vector<16x32xbf16>
    %cst_25 = arith.constant dense<0.000000e+00> : vector<16x128xf32>
    %21 = tpu.matmul %20, %9, %cst_25 {dimension_numbers = #tpu.dot_dimension_numbers<[1], [0], [0], [1], [0, 0, 1, 1], [], []>} : vector<16x32xbf16>, vector<32x128xbf16>, vector<16x128xf32> -> vector<16x128xf32>
    %22 = arith.addf %19, %21 : vector<16x128xf32>
    %23 = arith.negf %22 : vector<16x128xf32>
    %24 = math.exp %23 : vector<16x128xf32>
    %cst_26 = arith.constant 1.000000e+00 : f32
    %25 = vector.broadcast %cst_26 : f32 to vector<16x128xf32>
    %26 = arith.addf %25, %24 : vector<16x128xf32>
    %27 = arith.divf %25, %26 : vector<16x128xf32>
    %28 = vector.extract_strided_slice %27 {offsets = [0, 0], sizes = [16, 32], strides = [1, 1]} : vector<16x128xf32> to vector<16x32xf32>
    %29 = vector.extract_strided_slice %27 {offsets = [0, 32], sizes = [16, 32], strides = [1, 1]} : vector<16x128xf32> to vector<16x32xf32>
    %30 = vector.extract_strided_slice %27 {offsets = [0, 96], sizes = [16, 32], strides = [1, 1]} : vector<16x128xf32> to vector<16x32xf32>
    %31 = vector.extract_strided_slice %22 {offsets = [0, 64], sizes = [16, 32], strides = [1, 1]} : vector<16x128xf32> to vector<16x32xf32>
    %32 = math.tanh %31 : vector<16x32xf32>
    %33 = arith.mulf %29, %16 : vector<16x32xf32>
    %34 = arith.mulf %28, %32 : vector<16x32xf32>
    %35 = arith.addf %33, %34 : vector<16x32xf32>
    %36 = math.tanh %35 : vector<16x32xf32>
    %37 = arith.mulf %30, %36 : vector<16x32xf32>
    %38 = vector.broadcast %c0_i32 : i32 to vector<16x1xi32>
    %39 = arith.cmpi sgt, %14, %38 : vector<16x1xi32>
    %40 = vector.shape_cast %39 : vector<16x1xi1> to vector<16x1xi1>
    %41 = vector.broadcast %40 : vector<16x1xi1> to vector<16x32xi1>
    %42 = arith.select %41, %37, %15 : vector<16x32xi1>, vector<16x32xf32>
    %43 = vector.shape_cast %39 : vector<16x1xi1> to vector<16x1xi1>
    %44 = vector.broadcast %43 : vector<16x1xi1> to vector<16x32xi1>
    %45 = arith.select %44, %35, %16 : vector<16x32xi1>, vector<16x32xf32>
    %c1_i32 = arith.constant 1 : i32
    %46 = arith.index_cast %c1_i32 : i32 to index
    %c0_27 = arith.constant 0 : index
    %c0_28 = arith.constant 0 : index
    %47 = vector.load %arg12[%46, %c0_27, %c0_28] : memref<8x16x128xf32, #tpu.memory_space<vmem>>, vector<1x16x128xf32>
    %48 = vector.shape_cast %47 : vector<1x16x128xf32> to vector<16x128xf32>
    %49 = arith.truncf %42 : vector<16x32xf32> to vector<16x32xbf16>
    %cst_29 = arith.constant dense<0.000000e+00> : vector<16x128xf32>
    %50 = tpu.matmul %49, %9, %cst_29 {dimension_numbers = #tpu.dot_dimension_numbers<[1], [0], [0], [1], [0, 0, 1, 1], [], []>} : vector<16x32xbf16>, vector<32x128xbf16>, vector<16x128xf32> -> vector<16x128xf32>
    %51 = arith.addf %48, %50 : vector<16x128xf32>
    %52 = arith.negf %51 : vector<16x128xf32>
    %53 = math.exp %52 : vector<16x128xf32>
    %cst_30 = arith.constant 1.000000e+00 : f32
    %54 = vector.broadcast %cst_30 : f32 to vector<16x128xf32>
    %55 = arith.addf %54, %53 : vector<16x128xf32>
    %56 = arith.divf %54, %55 : vector<16x128xf32>
    %57 = vector.extract_strided_slice %56 {offsets = [0, 0], sizes = [16, 32], strides = [1, 1]} : vector<16x128xf32> to vector<16x32xf32>
    %58 = vector.extract_strided_slice %56 {offsets = [0, 32], sizes = [16, 32], strides = [1, 1]} : vector<16x128xf32> to vector<16x32xf32>
    %59 = vector.extract_strided_slice %56 {offsets = [0, 96], sizes = [16, 32], strides = [1, 1]} : vector<16x128xf32> to vector<16x32xf32>
    %60 = vector.extract_strided_slice %51 {offsets = [0, 64], sizes = [16, 32], strides = [1, 1]} : vector<16x128xf32> to vector<16x32xf32>
    %61 = math.tanh %60 : vector<16x32xf32>
    %62 = arith.mulf %58, %45 : vector<16x32xf32>
    %63 = arith.mulf %57, %61 : vector<16x32xf32>
    %64 = arith.addf %62, %63 : vector<16x32xf32>
    %65 = math.tanh %64 : vector<16x32xf32>
    %66 = arith.mulf %59, %65 : vector<16x32xf32>
    %67 = vector.broadcast %c1_i32 : i32 to vector<16x1xi32>
    %68 = arith.cmpi sgt, %14, %67 : vector<16x1xi32>
    %69 = vector.shape_cast %68 : vector<16x1xi1> to vector<16x1xi1>
    %70 = vector.broadcast %69 : vector<16x1xi1> to vector<16x32xi1>
    %71 = arith.select %70, %66, %42 : vector<16x32xi1>, vector<16x32xf32>
    %72 = vector.shape_cast %68 : vector<16x1xi1> to vector<16x1xi1>
    %73 = vector.broadcast %72 : vector<16x1xi1> to vector<16x32xi1>
    %74 = arith.select %73, %64, %45 : vector<16x32xi1>, vector<16x32xf32>
    %c2_i32 = arith.constant 2 : i32
    %75 = arith.index_cast %c2_i32 : i32 to index
    %c0_31 = arith.constant 0 : index
    %c0_32 = arith.constant 0 : index
    %76 = vector.load %arg12[%75, %c0_31, %c0_32] : memref<8x16x128xf32, #tpu.memory_space<vmem>>, vector<1x16x128xf32>
    %77 = vector.shape_cast %76 : vector<1x16x128xf32> to vector<16x128xf32>
    %78 = arith.truncf %71 : vector<16x32xf32> to vector<16x32xbf16>
    %cst_33 = arith.constant dense<0.000000e+00> : vector<16x128xf32>
    %79 = tpu.matmul %78, %9, %cst_33 {dimension_numbers = #tpu.dot_dimension_numbers<[1], [0], [0], [1], [0, 0, 1, 1], [], []>} : vector<16x32xbf16>, vector<32x128xbf16>, vector<16x128xf32> -> vector<16x128xf32>
    %80 = arith.addf %77, %79 : vector<16x128xf32>
    %81 = arith.negf %80 : vector<16x128xf32>
    %82 = math.exp %81 : vector<16x128xf32>
    %cst_34 = arith.constant 1.000000e+00 : f32
    %83 = vector.broadcast %cst_34 : f32 to vector<16x128xf32>
    %84 = arith.addf %83, %82 : vector<16x128xf32>
    %85 = arith.divf %83, %84 : vector<16x128xf32>
    %86 = vector.extract_strided_slice %85 {offsets = [0, 0], sizes = [16, 32], strides = [1, 1]} : vector<16x128xf32> to vector<16x32xf32>
    %87 = vector.extract_strided_slice %85 {offsets = [0, 32], sizes = [16, 32], strides = [1, 1]} : vector<16x128xf32> to vector<16x32xf32>
    %88 = vector.extract_strided_slice %85 {offsets = [0, 96], sizes = [16, 32], strides = [1, 1]} : vector<16x128xf32> to vector<16x32xf32>
    %89 = vector.extract_strided_slice %80 {offsets = [0, 64], sizes = [16, 32], strides = [1, 1]} : vector<16x128xf32> to vector<16x32xf32>
    %90 = math.tanh %89 : vector<16x32xf32>
    %91 = arith.mulf %87, %74 : vector<16x32xf32>
    %92 = arith.mulf %86, %90 : vector<16x32xf32>
    %93 = arith.addf %91, %92 : vector<16x32xf32>
    %94 = math.tanh %93 : vector<16x32xf32>
    %95 = arith.mulf %88, %94 : vector<16x32xf32>
    %96 = vector.broadcast %c2_i32 : i32 to vector<16x1xi32>
    %97 = arith.cmpi sgt, %14, %96 : vector<16x1xi32>
    %98 = vector.shape_cast %97 : vector<16x1xi1> to vector<16x1xi1>
    %99 = vector.broadcast %98 : vector<16x1xi1> to vector<16x32xi1>
    %100 = arith.select %99, %95, %71 : vector<16x32xi1>, vector<16x32xf32>
    %101 = vector.shape_cast %97 : vector<16x1xi1> to vector<16x1xi1>
    %102 = vector.broadcast %101 : vector<16x1xi1> to vector<16x32xi1>
    %103 = arith.select %102, %93, %74 : vector<16x32xi1>, vector<16x32xf32>
    %c3_i32 = arith.constant 3 : i32
    %104 = arith.index_cast %c3_i32 : i32 to index
    %c0_35 = arith.constant 0 : index
    %c0_36 = arith.constant 0 : index
    %105 = vector.load %arg12[%104, %c0_35, %c0_36] : memref<8x16x128xf32, #tpu.memory_space<vmem>>, vector<1x16x128xf32>
    %106 = vector.shape_cast %105 : vector<1x16x128xf32> to vector<16x128xf32>
    %107 = arith.truncf %100 : vector<16x32xf32> to vector<16x32xbf16>
    %cst_37 = arith.constant dense<0.000000e+00> : vector<16x128xf32>
    %108 = tpu.matmul %107, %9, %cst_37 {dimension_numbers = #tpu.dot_dimension_numbers<[1], [0], [0], [1], [0, 0, 1, 1], [], []>} : vector<16x32xbf16>, vector<32x128xbf16>, vector<16x128xf32> -> vector<16x128xf32>
    %109 = arith.addf %106, %108 : vector<16x128xf32>
    %110 = arith.negf %109 : vector<16x128xf32>
    %111 = math.exp %110 : vector<16x128xf32>
    %cst_38 = arith.constant 1.000000e+00 : f32
    %112 = vector.broadcast %cst_38 : f32 to vector<16x128xf32>
    %113 = arith.addf %112, %111 : vector<16x128xf32>
    %114 = arith.divf %112, %113 : vector<16x128xf32>
    %115 = vector.extract_strided_slice %114 {offsets = [0, 0], sizes = [16, 32], strides = [1, 1]} : vector<16x128xf32> to vector<16x32xf32>
    %116 = vector.extract_strided_slice %114 {offsets = [0, 32], sizes = [16, 32], strides = [1, 1]} : vector<16x128xf32> to vector<16x32xf32>
    %117 = vector.extract_strided_slice %114 {offsets = [0, 96], sizes = [16, 32], strides = [1, 1]} : vector<16x128xf32> to vector<16x32xf32>
    %118 = vector.extract_strided_slice %109 {offsets = [0, 64], sizes = [16, 32], strides = [1, 1]} : vector<16x128xf32> to vector<16x32xf32>
    %119 = math.tanh %118 : vector<16x32xf32>
    %120 = arith.mulf %116, %103 : vector<16x32xf32>
    %121 = arith.mulf %115, %119 : vector<16x32xf32>
    %122 = arith.addf %120, %121 : vector<16x32xf32>
    %123 = math.tanh %122 : vector<16x32xf32>
    %124 = arith.mulf %117, %123 : vector<16x32xf32>
    %125 = vector.broadcast %c3_i32 : i32 to vector<16x1xi32>
    %126 = arith.cmpi sgt, %14, %125 : vector<16x1xi32>
    %127 = vector.shape_cast %126 : vector<16x1xi1> to vector<16x1xi1>
    %128 = vector.broadcast %127 : vector<16x1xi1> to vector<16x32xi1>
    %129 = arith.select %128, %124, %100 : vector<16x32xi1>, vector<16x32xf32>
    %130 = vector.shape_cast %126 : vector<16x1xi1> to vector<16x1xi1>
    %131 = vector.broadcast %130 : vector<16x1xi1> to vector<16x32xi1>
    %132 = arith.select %131, %122, %103 : vector<16x32xi1>, vector<16x32xf32>
    %c4_i32 = arith.constant 4 : i32
    %133 = arith.index_cast %c4_i32 : i32 to index
    %c0_39 = arith.constant 0 : index
    %c0_40 = arith.constant 0 : index
    %134 = vector.load %arg12[%133, %c0_39, %c0_40] : memref<8x16x128xf32, #tpu.memory_space<vmem>>, vector<1x16x128xf32>
    %135 = vector.shape_cast %134 : vector<1x16x128xf32> to vector<16x128xf32>
    %136 = arith.truncf %129 : vector<16x32xf32> to vector<16x32xbf16>
    %cst_41 = arith.constant dense<0.000000e+00> : vector<16x128xf32>
    %137 = tpu.matmul %136, %9, %cst_41 {dimension_numbers = #tpu.dot_dimension_numbers<[1], [0], [0], [1], [0, 0, 1, 1], [], []>} : vector<16x32xbf16>, vector<32x128xbf16>, vector<16x128xf32> -> vector<16x128xf32>
    %138 = arith.addf %135, %137 : vector<16x128xf32>
    %139 = arith.negf %138 : vector<16x128xf32>
    %140 = math.exp %139 : vector<16x128xf32>
    %cst_42 = arith.constant 1.000000e+00 : f32
    %141 = vector.broadcast %cst_42 : f32 to vector<16x128xf32>
    %142 = arith.addf %141, %140 : vector<16x128xf32>
    %143 = arith.divf %141, %142 : vector<16x128xf32>
    %144 = vector.extract_strided_slice %143 {offsets = [0, 0], sizes = [16, 32], strides = [1, 1]} : vector<16x128xf32> to vector<16x32xf32>
    %145 = vector.extract_strided_slice %143 {offsets = [0, 32], sizes = [16, 32], strides = [1, 1]} : vector<16x128xf32> to vector<16x32xf32>
    %146 = vector.extract_strided_slice %143 {offsets = [0, 96], sizes = [16, 32], strides = [1, 1]} : vector<16x128xf32> to vector<16x32xf32>
    %147 = vector.extract_strided_slice %138 {offsets = [0, 64], sizes = [16, 32], strides = [1, 1]} : vector<16x128xf32> to vector<16x32xf32>
    %148 = math.tanh %147 : vector<16x32xf32>
    %149 = arith.mulf %145, %132 : vector<16x32xf32>
    %150 = arith.mulf %144, %148 : vector<16x32xf32>
    %151 = arith.addf %149, %150 : vector<16x32xf32>
    %152 = math.tanh %151 : vector<16x32xf32>
    %153 = arith.mulf %146, %152 : vector<16x32xf32>
    %154 = vector.broadcast %c4_i32 : i32 to vector<16x1xi32>
    %155 = arith.cmpi sgt, %14, %154 : vector<16x1xi32>
    %156 = vector.shape_cast %155 : vector<16x1xi1> to vector<16x1xi1>
    %157 = vector.broadcast %156 : vector<16x1xi1> to vector<16x32xi1>
    %158 = arith.select %157, %153, %129 : vector<16x32xi1>, vector<16x32xf32>
    %159 = vector.shape_cast %155 : vector<16x1xi1> to vector<16x1xi1>
    %160 = vector.broadcast %159 : vector<16x1xi1> to vector<16x32xi1>
    %161 = arith.select %160, %151, %132 : vector<16x32xi1>, vector<16x32xf32>
    %c5_i32 = arith.constant 5 : i32
    %162 = arith.index_cast %c5_i32 : i32 to index
    %c0_43 = arith.constant 0 : index
    %c0_44 = arith.constant 0 : index
    %163 = vector.load %arg12[%162, %c0_43, %c0_44] : memref<8x16x128xf32, #tpu.memory_space<vmem>>, vector<1x16x128xf32>
    %164 = vector.shape_cast %163 : vector<1x16x128xf32> to vector<16x128xf32>
    %165 = arith.truncf %158 : vector<16x32xf32> to vector<16x32xbf16>
    %cst_45 = arith.constant dense<0.000000e+00> : vector<16x128xf32>
    %166 = tpu.matmul %165, %9, %cst_45 {dimension_numbers = #tpu.dot_dimension_numbers<[1], [0], [0], [1], [0, 0, 1, 1], [], []>} : vector<16x32xbf16>, vector<32x128xbf16>, vector<16x128xf32> -> vector<16x128xf32>
    %167 = arith.addf %164, %166 : vector<16x128xf32>
    %168 = arith.negf %167 : vector<16x128xf32>
    %169 = math.exp %168 : vector<16x128xf32>
    %cst_46 = arith.constant 1.000000e+00 : f32
    %170 = vector.broadcast %cst_46 : f32 to vector<16x128xf32>
    %171 = arith.addf %170, %169 : vector<16x128xf32>
    %172 = arith.divf %170, %171 : vector<16x128xf32>
    %173 = vector.extract_strided_slice %172 {offsets = [0, 0], sizes = [16, 32], strides = [1, 1]} : vector<16x128xf32> to vector<16x32xf32>
    %174 = vector.extract_strided_slice %172 {offsets = [0, 32], sizes = [16, 32], strides = [1, 1]} : vector<16x128xf32> to vector<16x32xf32>
    %175 = vector.extract_strided_slice %172 {offsets = [0, 96], sizes = [16, 32], strides = [1, 1]} : vector<16x128xf32> to vector<16x32xf32>
    %176 = vector.extract_strided_slice %167 {offsets = [0, 64], sizes = [16, 32], strides = [1, 1]} : vector<16x128xf32> to vector<16x32xf32>
    %177 = math.tanh %176 : vector<16x32xf32>
    %178 = arith.mulf %174, %161 : vector<16x32xf32>
    %179 = arith.mulf %173, %177 : vector<16x32xf32>
    %180 = arith.addf %178, %179 : vector<16x32xf32>
    %181 = math.tanh %180 : vector<16x32xf32>
    %182 = arith.mulf %175, %181 : vector<16x32xf32>
    %183 = vector.broadcast %c5_i32 : i32 to vector<16x1xi32>
    %184 = arith.cmpi sgt, %14, %183 : vector<16x1xi32>
    %185 = vector.shape_cast %184 : vector<16x1xi1> to vector<16x1xi1>
    %186 = vector.broadcast %185 : vector<16x1xi1> to vector<16x32xi1>
    %187 = arith.select %186, %182, %158 : vector<16x32xi1>, vector<16x32xf32>
    %188 = vector.shape_cast %184 : vector<16x1xi1> to vector<16x1xi1>
    %189 = vector.broadcast %188 : vector<16x1xi1> to vector<16x32xi1>
    %190 = arith.select %189, %180, %161 : vector<16x32xi1>, vector<16x32xf32>
    %c6_i32 = arith.constant 6 : i32
    %191 = arith.index_cast %c6_i32 : i32 to index
    %c0_47 = arith.constant 0 : index
    %c0_48 = arith.constant 0 : index
    %192 = vector.load %arg12[%191, %c0_47, %c0_48] : memref<8x16x128xf32, #tpu.memory_space<vmem>>, vector<1x16x128xf32>
    %193 = vector.shape_cast %192 : vector<1x16x128xf32> to vector<16x128xf32>
    %194 = arith.truncf %187 : vector<16x32xf32> to vector<16x32xbf16>
    %cst_49 = arith.constant dense<0.000000e+00> : vector<16x128xf32>
    %195 = tpu.matmul %194, %9, %cst_49 {dimension_numbers = #tpu.dot_dimension_numbers<[1], [0], [0], [1], [0, 0, 1, 1], [], []>} : vector<16x32xbf16>, vector<32x128xbf16>, vector<16x128xf32> -> vector<16x128xf32>
    %196 = arith.addf %193, %195 : vector<16x128xf32>
    %197 = arith.negf %196 : vector<16x128xf32>
    %198 = math.exp %197 : vector<16x128xf32>
    %cst_50 = arith.constant 1.000000e+00 : f32
    %199 = vector.broadcast %cst_50 : f32 to vector<16x128xf32>
    %200 = arith.addf %199, %198 : vector<16x128xf32>
    %201 = arith.divf %199, %200 : vector<16x128xf32>
    %202 = vector.extract_strided_slice %201 {offsets = [0, 0], sizes = [16, 32], strides = [1, 1]} : vector<16x128xf32> to vector<16x32xf32>
    %203 = vector.extract_strided_slice %201 {offsets = [0, 32], sizes = [16, 32], strides = [1, 1]} : vector<16x128xf32> to vector<16x32xf32>
    %204 = vector.extract_strided_slice %201 {offsets = [0, 96], sizes = [16, 32], strides = [1, 1]} : vector<16x128xf32> to vector<16x32xf32>
    %205 = vector.extract_strided_slice %196 {offsets = [0, 64], sizes = [16, 32], strides = [1, 1]} : vector<16x128xf32> to vector<16x32xf32>
    %206 = math.tanh %205 : vector<16x32xf32>
    %207 = arith.mulf %203, %190 : vector<16x32xf32>
    %208 = arith.mulf %202, %206 : vector<16x32xf32>
    %209 = arith.addf %207, %208 : vector<16x32xf32>
    %210 = math.tanh %209 : vector<16x32xf32>
    %211 = arith.mulf %204, %210 : vector<16x32xf32>
    %212 = vector.broadcast %c6_i32 : i32 to vector<16x1xi32>
    %213 = arith.cmpi sgt, %14, %212 : vector<16x1xi32>
    %214 = vector.shape_cast %213 : vector<16x1xi1> to vector<16x1xi1>
    %215 = vector.broadcast %214 : vector<16x1xi1> to vector<16x32xi1>
    %216 = arith.select %215, %211, %187 : vector<16x32xi1>, vector<16x32xf32>
    %217 = vector.shape_cast %213 : vector<16x1xi1> to vector<16x1xi1>
    %218 = vector.broadcast %217 : vector<16x1xi1> to vector<16x32xi1>
    %219 = arith.select %218, %209, %190 : vector<16x32xi1>, vector<16x32xf32>
    %c7_i32 = arith.constant 7 : i32
    %220 = arith.index_cast %c7_i32 : i32 to index
    %c0_51 = arith.constant 0 : index
    %c0_52 = arith.constant 0 : index
    %221 = vector.load %arg12[%220, %c0_51, %c0_52] : memref<8x16x128xf32, #tpu.memory_space<vmem>>, vector<1x16x128xf32>
    %222 = vector.shape_cast %221 : vector<1x16x128xf32> to vector<16x128xf32>
    %223 = arith.truncf %216 : vector<16x32xf32> to vector<16x32xbf16>
    %cst_53 = arith.constant dense<0.000000e+00> : vector<16x128xf32>
    %224 = tpu.matmul %223, %9, %cst_53 {dimension_numbers = #tpu.dot_dimension_numbers<[1], [0], [0], [1], [0, 0, 1, 1], [], []>} : vector<16x32xbf16>, vector<32x128xbf16>, vector<16x128xf32> -> vector<16x128xf32>
    %225 = arith.addf %222, %224 : vector<16x128xf32>
    %226 = arith.negf %225 : vector<16x128xf32>
    %227 = math.exp %226 : vector<16x128xf32>
    %cst_54 = arith.constant 1.000000e+00 : f32
    %228 = vector.broadcast %cst_54 : f32 to vector<16x128xf32>
    %229 = arith.addf %228, %227 : vector<16x128xf32>
    %230 = arith.divf %228, %229 : vector<16x128xf32>
    %231 = vector.extract_strided_slice %230 {offsets = [0, 0], sizes = [16, 32], strides = [1, 1]} : vector<16x128xf32> to vector<16x32xf32>
    %232 = vector.extract_strided_slice %230 {offsets = [0, 32], sizes = [16, 32], strides = [1, 1]} : vector<16x128xf32> to vector<16x32xf32>
    %233 = vector.extract_strided_slice %230 {offsets = [0, 96], sizes = [16, 32], strides = [1, 1]} : vector<16x128xf32> to vector<16x32xf32>
    %234 = vector.extract_strided_slice %225 {offsets = [0, 64], sizes = [16, 32], strides = [1, 1]} : vector<16x128xf32> to vector<16x32xf32>
    %235 = math.tanh %234 : vector<16x32xf32>
    %236 = arith.mulf %232, %219 : vector<16x32xf32>
    %237 = arith.mulf %231, %235 : vector<16x32xf32>
    %238 = arith.addf %236, %237 : vector<16x32xf32>
    %239 = math.tanh %238 : vector<16x32xf32>
    %240 = arith.mulf %233, %239 : vector<16x32xf32>
    %241 = vector.broadcast %c7_i32 : i32 to vector<16x1xi32>
    %242 = arith.cmpi sgt, %14, %241 : vector<16x1xi32>
    %243 = vector.shape_cast %242 : vector<16x1xi1> to vector<16x1xi1>
    %244 = vector.broadcast %243 : vector<16x1xi1> to vector<16x32xi1>
    %245 = arith.select %244, %240, %216 : vector<16x32xi1>, vector<16x32xf32>
    %246 = vector.shape_cast %242 : vector<16x1xi1> to vector<16x1xi1>
    %247 = vector.broadcast %246 : vector<16x1xi1> to vector<16x32xi1>
    %248 = arith.select %247, %238, %219 : vector<16x32xi1>, vector<16x32xf32>
    %c8_i32 = arith.constant 8 : i32
    %c0_55 = arith.constant 0 : index
    %c0_56 = arith.constant 0 : index
    %249 = vector.load %arg2[%c0_55, %c0_56] : memref<16x32xf32, #tpu.memory_space<vmem>>, vector<16x32xf32>
    %cst_57 = arith.constant dense<0.000000e+00> : vector<16x32xf32>
    %250 = tpu.matmul %245, %10, %cst_57 {dimension_numbers = #tpu.dot_dimension_numbers<[1], [0], [0], [1], [0, 0, 1, 1], [], []>} : vector<16x32xf32>, vector<32x32xf32>, vector<16x32xf32> -> vector<16x32xf32>
    %251 = vector.broadcast %11 : vector<1x32xf32> to vector<16x32xf32>
    %252 = arith.addf %250, %251 : vector<16x32xf32>
    %cst_58 = arith.constant dense<0.000000e+00> : vector<16x32xf32>
    %253 = tpu.matmul %249, %12, %cst_58 {dimension_numbers = #tpu.dot_dimension_numbers<[1], [0], [0], [1], [0, 0, 1, 1], [], []>} : vector<16x32xf32>, vector<32x32xf32>, vector<16x32xf32> -> vector<16x32xf32>
    %254 = vector.broadcast %13 : vector<1x32xf32> to vector<16x32xf32>
    %255 = arith.addf %253, %254 : vector<16x32xf32>
    %256 = arith.maximumf %252, %255 : vector<16x32xf32>
    %257 = arith.subf %252, %256 : vector<16x32xf32>
    %258 = math.exp %257 : vector<16x32xf32>
    %259 = arith.subf %255, %256 : vector<16x32xf32>
    %260 = math.exp %259 : vector<16x32xf32>
    %261 = arith.addf %258, %260 : vector<16x32xf32>
    %262 = tpu.reciprocal %261 {approx = true} : vector<16x32xf32> -> vector<16x32xf32>
    %263 = arith.mulf %260, %262 : vector<16x32xf32>
    %264 = arith.mulf %263, %245 : vector<16x32xf32>
    %265 = arith.mulf %255, %249 : vector<16x32xf32>
    %266 = arith.addf %264, %265 : vector<16x32xf32>
    %c0_59 = arith.constant 0 : index
    %c0_60 = arith.constant 0 : index
    %267 = vector.load %arg11[%c0_59, %c0_60] : memref<16x32xf32, #tpu.memory_space<vmem>>, vector<16x32xf32>
    tpu.vector_store %arg11[%c0_59, %c0_60], %266 {strides = array<i32>} : memref<16x32xf32, #tpu.memory_space<vmem>>, vector<16x32xf32>,
    return
  }
  func.func @transform_0(%arg0: i32) -> (i32, i32, i32) {
    %c0_i32 = arith.constant 0 : i32
    %c0_i32_0 = arith.constant 0 : i32
    %c0_i32_1 = arith.constant 0 : i32
    return %c0_i32, %arg0, %c0_i32_0 : i32, i32, i32
  }
  func.func @transform_1(%arg0: i32) -> (i32, i32) {
    %c0_i32 = arith.constant 0 : i32
    %c0_i32_0 = arith.constant 0 : i32
    return %arg0, %c0_i32 : i32, i32
  }
  func.func @transform_2(%arg0: i32) -> (i32, i32) {
    %c0_i32 = arith.constant 0 : i32
    %c0_i32_0 = arith.constant 0 : i32
    return %arg0, %c0_i32 : i32, i32
  }
  func.func @transform_3(%arg0: i32) -> (i32, i32) {
    %c0_i32 = arith.constant 0 : i32
    %c0_i32_0 = arith.constant 0 : i32
    %c0_i32_1 = arith.constant 0 : i32
    return %c0_i32, %c0_i32_0 : i32, i32
  }
  func.func @transform_4(%arg0: i32) -> (i32, i32) {
    %c0_i32 = arith.constant 0 : i32
    %c0_i32_0 = arith.constant 0 : i32
    %c0_i32_1 = arith.constant 0 : i32
    return %c0_i32, %c0_i32_0 : i32, i32
  }
  func.func @transform_5(%arg0: i32) -> (i32, i32) {
    %c0_i32 = arith.constant 0 : i32
    %c0_i32_0 = arith.constant 0 : i32
    %c0_i32_1 = arith.constant 0 : i32
    return %c0_i32, %c0_i32_0 : i32, i32
  }
  func.func @transform_6(%arg0: i32) -> (i32, i32) {
    %c0_i32 = arith.constant 0 : i32
    %c0_i32_0 = arith.constant 0 : i32
    %c0_i32_1 = arith.constant 0 : i32
    return %c0_i32, %c0_i32_0 : i32, i32
  }
  func.func @transform_7(%arg0: i32) -> (i32, i32) {
    %c0_i32 = arith.constant 0 : i32
    %c0_i32_0 = arith.constant 0 : i32
    %c0_i32_1 = arith.constant 0 : i32
    return %c0_i32, %c0_i32_0 : i32, i32
  }
  func.func @transform_8(%arg0: i32) -> (i32, i32) {
    %c0_i32 = arith.constant 0 : i32
    %c0_i32_0 = arith.constant 0 : i32
    %c0_i32_1 = arith.constant 0 : i32
    return %c0_i32, %c0_i32_0 : i32, i32
  }
  func.func @transform_9(%arg0: i32) -> (i32, i32) {
    %c0_i32 = arith.constant 0 : i32
    %c0_i32_0 = arith.constant 0 : i32
    %c0_i32_1 = arith.constant 0 : i32
    return %c0_i32, %c0_i32_0 : i32, i32
  }
  func.func @transform_10(%arg0: i32) -> (i32, i32) {
    %c0_i32 = arith.constant 0 : i32
    %c0_i32_0 = arith.constant 0 : i32
    return %arg0, %c0_i32 : i32, i32
  }
}

</mosaic_0001>

<llo_original>
// kernel: tpu_custom_call.1
$region0: #{tpu_custom_call.1}
  #allocation0 [shape = 'u32[]', space=smem, size = 0x4, offset = 0x4, fixed_abs, tag = 'smem constant byte address 0x4 - core index']
  #allocation1 [shape = 'u32[144,128]{1,0:T(1,128)}', space=vmem, size = 0x12000, scoped, tag = 'internal scratch']
  #allocation2 [shape = 'f32[8,16,128]{2,1,0:T(8,128)}', space=vmem, size = 0x10000, scoped, tag = 'scratch operand']
  %s0 = inlined_call_operand.hbm [shape: bf16[8,16,32], index: 0, kind: input, shape index: {}]
  %s1 = inlined_call_operand.hbm [shape: f32[16,32], index: 1, kind: input, shape index: {}]
  %s2 = inlined_call_operand.vmem [shape: s32[16,1], index: 2, kind: input, shape index: {}]
  %s3 = inlined_call_operand.hbm [shape: bf16[32,128], index: 3, kind: input, shape index: {}]
  %s4 = inlined_call_operand.hbm [shape: bf16[32,128], index: 4, kind: input, shape index: {}]
  %s5 = inlined_call_operand.vmem [shape: f32[1,128], index: 5, kind: input, shape index: {}]
  %s6 = inlined_call_operand.vmem [shape: f32[32,32], index: 6, kind: input, shape index: {}]
  %s7 = inlined_call_operand.vmem [shape: f32[1,32], index: 7, kind: input, shape index: {}]
  %s8 = inlined_call_operand.hbm [shape: f32[32,32], index: 8, kind: input, shape index: {}]
  %s9 = inlined_call_operand.vmem [shape: f32[1,32], index: 9, kind: input, shape index: {}]
  %s10 = inlined_call_operand.hbm [shape: f32[16,32], index: 10, kind: output, shape index: {}]
  %s11 = sld [smem:[#allocation0]]
  $region70: #{tpu_custom_call.1} parent=0
    _
  %s13 = ssub.s32 1, %s11
  %s14 = scalar_select 0, %s13, %s11
  $region1: #{tpu_custom_call.1} parent=0
    #allocation3 [shape = 'u8[32768]{0}', space=vmem, size = 0x8000, scoped, tag = 'input window, operand 0, single buffered']
    #allocation4 [shape = 's32[1]{0}', space=sflag, size = 0x4, scoped, tag = 'scoped memory for tpu_custom_call.1']
    #allocation5 [shape = 's32[1]{0}', space=sflag, size = 0x4, scoped, tag = 'scoped memory for tpu_custom_call.1']
    #allocation6 [shape = 'u8[8192]{0}', space=vmem, size = 0x2000, scoped, tag = 'input window, operand 1, single buffered']
    #allocation7 [shape = 's32[1]{0}', space=sflag, size = 0x4, scoped, tag = 'scoped memory for tpu_custom_call.1']
    #allocation8 [shape = 'u8[8192]{0}', space=vmem, size = 0x2000, scoped, tag = 'input window, operand 3, single buffered']
    #allocation9 [shape = 'u8[8192]{0}', space=vmem, size = 0x2000, scoped, tag = 'input window, operand 4, single buffered']
    #allocation10 [shape = 's32[1]{0}', space=sflag, size = 0x4, scoped, tag = 'scoped memory for tpu_custom_call.1']
    #allocation11 [shape = 'u8[16384]{0}', space=vmem, size = 0x4000, scoped, tag = 'input window, operand 8, single buffered']
    #allocation12 [shape = 'u8[8192]{0}', space=vmem, size = 0x2000, scoped, tag = 'output window, operand 0, single buffered']
    %15 = vsyncpa [#allocation4], 0
    %16 = vsyncpa [#allocation7], 0
    %17 = vsyncpa [#allocation10], 0
    %18 = vsyncpa [#allocation5], 0
    // Predicated region
    $region2: #{tpu_custom_call.1} parent=1 // pred_check
      _
    $region3: #{tpu_custom_call.1} parent=1 // pred_check_branch
      %20 = sbr.rel (0) target = $region5
    $region4: #{tpu_custom_call.1} parent=1 // pred_region
      %s22 = ssub.s32 1024, 1024
      %23 = vsyncadd [#allocation4], %s22
      %s24 = sshll.u32 [#allocation3], 4
      %s25 = int_to_ptr.vmem [resolvable:$true] %s24
      %30 = dma.hbm_to_vmem [thread:$0]  %s0, 1024, %s25, [#allocation4], 64, 64, 4
    $region5: #{tpu_custom_call.1} parent=1 // pred_fallthru
      _
    // Predicated region
    $region6: #{tpu_custom_call.1} parent=1 // pred_check
      _
    $region7: #{tpu_custom_call.1} parent=1 // pred_check_branch
      %32 = sbr.rel (0) target = $region9
    $region8: #{tpu_custom_call.1} parent=1 // pred_region
      %s34 = ssub.s32 256, 256
      %35 = vsyncadd [#allocation7], %s34
      %s36 = sshll.u32 [#allocation6], 4
      %s37 = int_to_ptr.vmem [resolvable:$true] %s36
      %42 = dma.hbm_to_vmem [thread:$0]  %s1, 256, %s37, [#allocation7], 128, 128, 8
    $region9: #{tpu_custom_call.1} parent=1 // pred_fallthru
      _
    // Predicated region
    $region10: #{tpu_custom_call.1} parent=1 // pred_check
      _
    $region11: #{tpu_custom_call.1} parent=1 // pred_check_branch
      %44 = sbr.rel (0) target = $region13
    $region12: #{tpu_custom_call.1} parent=1 // pred_region
      _
    $region13: #{tpu_custom_call.1} parent=1 // pred_fallthru
      _
    // Predicated region
    $region14: #{tpu_custom_call.1} parent=1 // pred_check
      _
    $region15: #{tpu_custom_call.1} parent=1 // pred_check_branch
      %46 = sbr.rel (0) target = $region17
    $region16: #{tpu_custom_call.1} parent=1 // pred_region
      %s48 = ssub.s32 256, 256
      %49 = vsyncadd [#allocation7], %s48
      %s50 = sshll.u32 [#allocation8], 4
      %s51 = int_to_ptr.vmem [resolvable:$true] %s50
      %56 = dma.hbm_to_vmem [thread:$0]  %s3, 256, %s51, [#allocation7], 64, 64, 4
    $region17: #{tpu_custom_call.1} parent=1 // pred_fallthru
      _
    // Predicated region
    $region18: #{tpu_custom_call.1} parent=1 // pred_check
      _
    $region19: #{tpu_custom_call.1} parent=1 // pred_check_branch
      %58 = sbr.rel (0) target = $region21
    $region20: #{tpu_custom_call.1} parent=1 // pred_region
      %s60 = ssub.s32 256, 256
      %61 = vsyncadd [#allocation10], %s60
      %s62 = sshll.u32 [#allocation9], 4
      %s63 = int_to_ptr.vmem [resolvable:$true] %s62
      %68 = dma.hbm_to_vmem [thread:$0]  %s4, 256, %s63, [#allocation10], 64, 64, 4
    $region21: #{tpu_custom_call.1} parent=1 // pred_fallthru
      _
    // Predicated region
    $region22: #{tpu_custom_call.1} parent=1 // pred_check
      _
    $region23: #{tpu_custom_call.1} parent=1 // pred_check_branch
      %70 = sbr.rel (0) target = $region25
    $region24: #{tpu_custom_call.1} parent=1 // pred_region
      _
    $region25: #{tpu_custom_call.1} parent=1 // pred_fallthru
      _
    // Predicated region
    $region26: #{tpu_custom_call.1} parent=1 // pred_check
      _
    $region27: #{tpu_custom_call.1} parent=1 // pred_check_branch
      %72 = sbr.rel (0) target = $region29
    $region28: #{tpu_custom_call.1} parent=1 // pred_region
      _
    $region29: #{tpu_custom_call.1} parent=1 // pred_fallthru
      _
    // Predicated region
    $region30: #{tpu_custom_call.1} parent=1 // pred_check
      _
    $region31: #{tpu_custom_call.1} parent=1 // pred_check_branch
      %74 = sbr.rel (0) target = $region33
    $region32: #{tpu_custom_call.1} parent=1 // pred_region
      _
    $region33: #{tpu_custom_call.1} parent=1 // pred_fallthru
      _
    // Predicated region
    $region34: #{tpu_custom_call.1} parent=1 // pred_check
      _
    $region35: #{tpu_custom_call.1} parent=1 // pred_check_branch
      %76 = sbr.rel (0) target = $region37
    $region36: #{tpu_custom_call.1} parent=1 // pred_region
      %s78 = ssub.s32 512, 512
      %79 = vsyncadd [#allocation10], %s78
      %s80 = sshll.u32 [#allocation11], 4
      %s81 = int_to_ptr.vmem [resolvable:$true] %s80
      %86 = dma.hbm_to_vmem [thread:$0]  %s8, 512, %s81, [#allocation10], 128, 128, 8
    $region37: #{tpu_custom_call.1} parent=1 // pred_fallthru
      _
    // Predicated region
    $region38: #{tpu_custom_call.1} parent=1 // pred_check
      _
    $region39: #{tpu_custom_call.1} parent=1 // pred_check_branch
      %88 = sbr.rel (0) target = $region41
    $region40: #{tpu_custom_call.1} parent=1 // pred_region
      _
    $region41: #{tpu_custom_call.1} parent=1 // pred_fallthru
      _
    // Predicated region
    $region42: #{tpu_custom_call.1} parent=1 // pred_check
      _
    $region43: #{tpu_custom_call.1} parent=1 // pred_check_branch
      %90 = sbr.rel (0) target = $region45
    $region44: #{tpu_custom_call.1} parent=1 // pred_region
      %91 = dma.done [#allocation4], 1024
    $region45: #{tpu_custom_call.1} parent=1 // pred_fallthru
      _
    // Predicated region
    $region46: #{tpu_custom_call.1} parent=1 // pred_check
      _
    $region47: #{tpu_custom_call.1} parent=1 // pred_check_branch
      %93 = sbr.rel (0) target = $region49
    $region48: #{tpu_custom_call.1} parent=1 // pred_region
      %94 = dma.done [#allocation7], 256
    $region49: #{tpu_custom_call.1} parent=1 // pred_fallthru
      _
    // Predicated region
    $region50: #{tpu_custom_call.1} parent=1 // pred_check
      _
    $region51: #{tpu_custom_call.1} parent=1 // pred_check_branch
      %96 = sbr.rel (0) target = $region53
    $region52: #{tpu_custom_call.1} parent=1 // pred_region
      %97 = dma.done [#allocation7], 256
    $region53: #{tpu_custom_call.1} parent=1 // pred_fallthru
      _
    // Predicated region
    $region54: #{tpu_custom_call.1} parent=1 // pred_check
      _
    $region55: #{tpu_custom_call.1} parent=1 // pred_check_branch
      %99 = sbr.rel (0) target = $region57
    $region56: #{tpu_custom_call.1} parent=1 // pred_region
      %100 = dma.done [#allocation10], 256
    $region57: #{tpu_custom_call.1} parent=1 // pred_fallthru
      _
    // Predicated region
    $region58: #{tpu_custom_call.1} parent=1 // pred_check
      _
    $region59: #{tpu_custom_call.1} parent=1 // pred_check_branch
      %102 = sbr.rel (0) target = $region61
    $region60: #{tpu_custom_call.1} parent=1 // pred_region
      %103 = dma.done [#allocation10], 512
    $region61: #{tpu_custom_call.1} parent=1 // pred_fallthru
      _
    %v105 = vld [vmem:[#allocation3] sm:$0xf]
    %v106 = vld [vmem:[#allocation3 + $0x4] sm:$0xf]
    %v107 = vld [vmem:[#allocation3 + $0x8] sm:$0xf]
    %v108 = vld [vmem:[#allocation3 + $0xc] sm:$0xf]
    %v109 = vld [vmem:[#allocation3 + $0x10] sm:$0xf]
    %v110 = vld [vmem:[#allocation3 + $0x14] sm:$0xf]
    %v111 = vld [vmem:[#allocation3 + $0x18] sm:$0xf]
    %v112 = vld [vmem:[#allocation3 + $0x1c] sm:$0xf]
    %v113 = vld [vmem:[#allocation3 + $0x20] sm:$0xf]
    %v114 = vld [vmem:[#allocation3 + $0x24] sm:$0xf]
    %v115 = vld [vmem:[#allocation3 + $0x28] sm:$0xf]
    %v116 = vld [vmem:[#allocation3 + $0x2c] sm:$0xf]
    %v117 = vld [vmem:[#allocation3 + $0x30] sm:$0xf]
    %v118 = vld [vmem:[#allocation3 + $0x34] sm:$0xf]
    %v119 = vld [vmem:[#allocation3 + $0x38] sm:$0xf]
    %v120 = vld [vmem:[#allocation3 + $0x3c] sm:$0xf]
    %v121 = vld [vmem:[#allocation8] sm:$0xf]
    %v122 = vld [vmem:[#allocation8 + $0x4] sm:$0xf]
    %v123 = vld [vmem:[#allocation8 + $0x8] sm:$0xf]
    %v124 = vld [vmem:[#allocation8 + $0xc] sm:$0xf]
    %v125 = vld [vmem:[%s5] sm:$0x1]
    %v127 = vlaneseq
    %v128 = vshrl.u32 %v127, 7
    %v129 = vsub.s32 0, %v128
    %v130 = vrot.slane %v125, %v129
    %v148 = vunpack.c.l.b16 %v105
    %v149 = vunpack.c.l.b16 %v106
    %v150 = vunpack.c.l.b16 %v107
    %v151 = vunpack.c.l.b16 %v108
    %v152 = vunpack.c.l.b16 %v109
    %v153 = vunpack.c.l.b16 %v110
    %v154 = vunpack.c.l.b16 %v111
    %v155 = vunpack.c.l.b16 %v112
    %v156 = vunpack.c.l.b16 %v113
    %v157 = vunpack.c.l.b16 %v114
    %v158 = vunpack.c.l.b16 %v115
    %v159 = vunpack.c.l.b16 %v116
    %v160 = vunpack.c.l.b16 %v117
    %v161 = vunpack.c.l.b16 %v118
    %v162 = vunpack.c.l.b16 %v119
    %v163 = vunpack.c.l.b16 %v120
    %v164 = vpack.c.b16 %v149, %v148
    %v165 = vpack.c.b16 %v151, %v150
    %v166 = vpack.c.b16 %v153, %v152
    %v167 = vpack.c.b16 %v155, %v154
    %v168 = vpack.c.b16 %v157, %v156
    %v169 = vpack.c.b16 %v159, %v158
    %v170 = vpack.c.b16 %v161, %v160
    %v171 = vpack.c.b16 %v163, %v162
    %v176 = vunpack.c.l.b16 %v121
    %v177 = vunpack.c.l.b16 %v122
    %v178 = vunpack.c.l.b16 %v123
    %v179 = vunpack.c.l.b16 %v124
    %v180 = vpack.c.b16 %v177, %v176
    %v181 = vpack.c.b16 %v179, %v178
    %vm184 = vcmask 261120
    %v186 = vsel %vm184, %v164, 0
    %v189 = vsel %vm184, %v165, 0
    %v192 = vsel %vm184, %v166, 0
    %v195 = vsel %vm184, %v167, 0
    %v198 = vsel %vm184, %v168, 0
    %v201 = vsel %vm184, %v169, 0
    %v204 = vsel %vm184, %v170, 0
    %v207 = vsel %vm184, %v171, 0
    %209 = vmatprep.subr.bf16.mxu0 0
    %210 = vmatpush1.bf16.msra.mxu0 %v180
    %211 = vmatprep.subr.bf16.mxu0 0
    %212 = vmatpush1.bf16.msra.mxu0 %v181
    %213 = vmatprep.subr.bf16.mxu0 0
    %214 = vmatpush1.bf16.msra.mxu0 0
    %215 = vmatprep.subr.bf16.mxu0 0
    %216 = vmatpush1.bf16.msra.mxu0 0
    %217 = vmatprep.subr.bf16.mxu0 0
    %218 = vmatpush1.bf16.msra.mxu0 0
    %219 = vmatprep.subr.bf16.mxu0 0
    %220 = vmatpush1.bf16.msra.mxu0 0
    %221 = vmatprep.subr.bf16.mxu0 0
    %222 = vmatpush1.bf16.msra.mxu0 0
    %223 = vmatprep.subr.bf16.mxu0 0
    %224 = vmatpush1.bf16.msra.mxu0 0
    %225 = vmatprep.subr.bf16.mxu0 0
    %226 = vmatpush1.bf16.msra.mxu0 0
    %227 = vmatprep.subr.bf16.mxu0 0
    %228 = vmatpush1.bf16.msra.mxu0 0
    %229 = vmatprep.subr.bf16.mxu0 0
    %230 = vmatpush1.bf16.msra.mxu0 0
    %231 = vmatprep.subr.bf16.mxu0 0
    %232 = vmatpush1.bf16.msra.mxu0 0
    %233 = vmatprep.subr.bf16.mxu0 0
    %234 = vmatpush1.bf16.msra.mxu0 0
    %235 = vmatprep.subr.bf16.mxu0 0
    %236 = vmatpush1.bf16.msra.mxu0 0
    %237 = vmatprep.subr.bf16.mxu0 0
    %238 = vmatpush1.bf16.msra.mxu0 0
    %239 = vmatprep.subr.bf16.mxu0 0
    %240 = vmatpush1.bf16.msra.mxu0 0
    %241 = vmatprep.mubr.bf16.mxu0 0
    %242 = vmatmul.mubr.bf16.gmra.mrb[0].mxu0 %v186
    %v243 = vpop.f32.mrb[0].mxu0
    %v244 = vadd.f32 %v130, %v243
    %v245 = vpop.f32.mrb[0].mxu0
    %v246 = vpop.f32.mrb[0].mxu0
    %v247 = vadd.f32 %v130, %v246
    %v248 = vpop.f32.mrb[0].mxu0
    %249 = vmatprep.mubr.bf16.mxu0 0
    %250 = vmatmul.mubr.bf16.gmra.mrb[0].mxu0 %v189
    %v251 = vpop.f32.mrb[0].mxu0
    %v252 = vadd.f32 %v130, %v251
    %v253 = vpop.f32.mrb[0].mxu0
    %v254 = vpop.f32.mrb[0].mxu0
    %v255 = vadd.f32 %v130, %v254
    %v256 = vpop.f32.mrb[0].mxu0
    %257 = vmatprep.mubr.bf16.mxu0 0
    %258 = vmatmul.mubr.bf16.gmra.mrb[0].mxu0 %v192
    %v259 = vpop.f32.mrb[0].mxu0
    %v260 = vadd.f32 %v130, %v259
    %v261 = vpop.f32.mrb[0].mxu0
    %v262 = vpop.f32.mrb[0].mxu0
    %v263 = vadd.f32 %v130, %v262
    %v264 = vpop.f32.mrb[0].mxu0
    %265 = vmatprep.mubr.bf16.mxu0 0
    %266 = vmatmul.mubr.bf16.gmra.mrb[0].mxu0 %v195
    %v267 = vpop.f32.mrb[0].mxu0
    %v268 = vadd.f32 %v130, %v267
    %v269 = vpop.f32.mrb[0].mxu0
    %v270 = vpop.f32.mrb[0].mxu0
    %v271 = vadd.f32 %v130, %v270
    %v272 = vpop.f32.mrb[0].mxu0
    %273 = vmatprep.mubr.bf16.mxu0 0
    %274 = vmatmul.mubr.bf16.gmra.mrb[0].mxu0 %v198
    %v275 = vpop.f32.mrb[0].mxu0
    %v276 = vadd.f32 %v130, %v275
    %v277 = vpop.f32.mrb[0].mxu0
    %v278 = vpop.f32.mrb[0].mxu0
    %v279 = vadd.f32 %v130, %v278
    %v280 = vpop.f32.mrb[0].mxu0
    %281 = vmatprep.mubr.bf16.mxu0 0
    %282 = vmatmul.mubr.bf16.gmra.mrb[0].mxu0 %v201
    %v283 = vpop.f32.mrb[0].mxu0
    %v284 = vadd.f32 %v130, %v283
    %v285 = vpop.f32.mrb[0].mxu0
    %v286 = vpop.f32.mrb[0].mxu0
    %v287 = vadd.f32 %v130, %v286
    %v288 = vpop.f32.mrb[0].mxu0
    %289 = vmatprep.mubr.bf16.mxu0 0
    %290 = vmatmul.mubr.bf16.gmra.mrb[0].mxu0 %v204
    %v291 = vpop.f32.mrb[0].mxu0
    %v292 = vadd.f32 %v130, %v291
    %v293 = vpop.f32.mrb[0].mxu0
    %v294 = vpop.f32.mrb[0].mxu0
    %v295 = vadd.f32 %v130, %v294
    %v296 = vpop.f32.mrb[0].mxu0
    %297 = vmatprep.mubr.bf16.mxu0 0
    %298 = vmatmul.mubr.bf16.gmra.mrb[0].mxu0 %v207
    %v299 = vpop.f32.mrb[0].mxu0
    %v300 = vadd.f32 %v130, %v299
    %v301 = vpop.f32.mrb[0].mxu0
    %v302 = vpop.f32.mrb[0].mxu0
    %v303 = vadd.f32 %v130, %v302
    %v304 = vpop.f32.mrb[0].mxu0
    %305 = vdwg.mxu0
    %306 = vst [vmem:[#allocation2] sm:$0xff] %v244
    %307 = vst [vmem:[#allocation2 + $0x8] sm:$0xff] %v247
    %308 = vst [vmem:[#allocation2 + $0x10] sm:$0xff] %v252
    %309 = vst [vmem:[#allocation2 + $0x18] sm:$0xff] %v255
    %310 = vst [vmem:[#allocation2 + $0x20] sm:$0xff] %v260
    %311 = vst [vmem:[#allocation2 + $0x28] sm:$0xff] %v263
    %312 = vst [vmem:[#allocation2 + $0x30] sm:$0xff] %v268
    %313 = vst [vmem:[#allocation2 + $0x38] sm:$0xff] %v271
    %314 = vst [vmem:[#allocation2 + $0x40] sm:$0xff] %v276
    %315 = vst [vmem:[#allocation2 + $0x48] sm:$0xff] %v279
    %316 = vst [vmem:[#allocation2 + $0x50] sm:$0xff] %v284
    %317 = vst [vmem:[#allocation2 + $0x58] sm:$0xff] %v287
    %318 = vst [vmem:[#allocation2 + $0x60] sm:$0xff] %v292
    %319 = vst [vmem:[#allocation2 + $0x68] sm:$0xff] %v295
    %320 = vst [vmem:[#allocation2 + $0x70] sm:$0xff] %v300
    %321 = vst [vmem:[#allocation2 + $0x78] sm:$0xff] %v303
    %v322 = vld [vmem:[#allocation9] sm:$0xf]
    %v323 = vld [vmem:[#allocation9 + $0x4] sm:$0xf]
    %v324 = vld [vmem:[#allocation9 + $0x8] sm:$0xf]
    %v325 = vld [vmem:[#allocation9 + $0xc] sm:$0xf]
    %v326 = vld [vmem:[%s6] sm:$0xff]
    %v327 = vld [vmem:[%s6 + $0x8] sm:$0xff]
    %v328 = vld [vmem:[%s6 + $0x10] sm:$0xff]
    %v329 = vld [vmem:[%s6 + $0x18] sm:$0xff]
    %v330 = vld [vmem:[%s7] sm:$0x1]
    %v331 = vld [vmem:[#allocation11] sm:$0xff]
    %v332 = vld [vmem:[#allocation11 + $0x8] sm:$0xff]
    %v333 = vld [vmem:[#allocation11 + $0x10] sm:$0xff]
    %v334 = vld [vmem:[#allocation11 + $0x18] sm:$0xff]
    %v335 = vld [vmem:[%s9] sm:$0x1]
    %v336 = vld [vmem:[%s2] sm:$0xff]
    %v337 = vld [vmem:[%s2 + $0x8] sm:$0xff]
    %v338 = vld [vmem:[#allocation2] sm:$0xff]
    %v339 = vld [vmem:[#allocation2 + $0x8] sm:$0xff]
    %v344 = vunpack.c.l.b16 %v322
    %v345 = vunpack.c.l.b16 %v323
    %v346 = vunpack.c.l.b16 %v324
    %v347 = vunpack.c.l.b16 %v325
    %v348 = vpack.c.b16 %v345, %v344
    %v349 = vpack.c.b16 %v347, %v346
    %v353 = vsel %vm184, 0, 0
    %355 = vmatprep.subr.bf16.mxu0 0
    %356 = vmatpush1.bf16.msra.mxu0 %v348
    %357 = vmatprep.subr.bf16.mxu0 0
    %358 = vmatpush1.bf16.msra.mxu0 %v349
    %359 = vmatprep.subr.bf16.mxu0 0
    %360 = vmatpush1.bf16.msra.mxu0 0
    %361 = vmatprep.subr.bf16.mxu0 0
    %362 = vmatpush1.bf16.msra.mxu0 0
    %363 = vmatprep.subr.bf16.mxu0 0
    %364 = vmatpush1.bf16.msra.mxu0 0
    %365 = vmatprep.subr.bf16.mxu0 0
    %366 = vmatpush1.bf16.msra.mxu0 0
    %367 = vmatprep.subr.bf16.mxu0 0
    %368 = vmatpush1.bf16.msra.mxu0 0
    %369 = vmatprep.subr.bf16.mxu0 0
    %370 = vmatpush1.bf16.msra.mxu0 0
    %371 = vmatprep.subr.bf16.mxu0 0
    %372 = vmatpush1.bf16.msra.mxu0 0
    %373 = vmatprep.subr.bf16.mxu0 0
    %374 = vmatpush1.bf16.msra.mxu0 0
    %375 = vmatprep.subr.bf16.mxu0 0
    %376 = vmatpush1.bf16.msra.mxu0 0
    %377 = vmatprep.subr.bf16.mxu0 0
    %378 = vmatpush1.bf16.msra.mxu0 0
    %379 = vmatprep.subr.bf16.mxu0 0
    %380 = vmatpush1.bf16.msra.mxu0 0
    %381 = vmatprep.subr.bf16.mxu0 0
    %382 = vmatpush1.bf16.msra.mxu0 0
    %383 = vmatprep.subr.bf16.mxu0 0
    %384 = vmatpush1.bf16.msra.mxu0 0
    %385 = vmatprep.subr.bf16.mxu0 0
    %386 = vmatpush1.bf16.msra.mxu0 0
    %387 = vmatprep.mubr.bf16.mxu0 0
    %388 = vmatmul.mubr.bf16.gmra.mrb[0].mxu0 %v353
    %v389 = vpop.f32.mrb[0].mxu0
    %v390 = vadd.f32 0.0, %v389
    %v391 = vpop.f32.mrb[0].mxu0
    %v392 = vpop.f32.mrb[0].mxu0
    %v393 = vadd.f32 0.0, %v392
    %v394 = vpop.f32.mrb[0].mxu0
    %395 = vdwg.mxu0
    %v396 = vadd.f32 %v338, %v390
    %v397 = vadd.f32 %v339, %v393
    %v398 = vxor.u32 %v396, 2147483648
    %v399 = vxor.u32 %v397, 2147483648
    %v400 = vmul.f32 %v398, 1.442695
    %v401 = vpow.pop %v400
    %v402 = vmul.f32 %v399, 1.442695
    %v403 = vpow.pop %v402
    %v404 = vadd.f32 %v401, 1.0
    %v405 = vadd.f32 %v403, 1.0
    %v406 = vrcp.pop %v404
    %v407 = vmul.f32 1.0, %v406
    %v408 = vrcp.pop %v405
    %v409 = vmul.f32 1.0, %v408
    %v410 = vtanh.pop %v396
    %v411 = vtanh.pop %v397
    %v412 = vmul.f32 %v407, 0.0
    %v413 = vmul.f32 %v409, 0.0
    %416 = vrot.lane.b32.xlu0 %v410, 64
    %v417 = vpop.permute.xlu0 %416
    %418 = vrot.lane.b32.xlu0 %v411, 64
    %v419 = vpop.permute.xlu0 %418
    %v422 = vmul.f32 %v407, %v417
    %v423 = vmul.f32 %v409, %v419
    %426 = vrot.lane.b32.xlu0 %v422, 32
    %v427 = vpop.permute.xlu0 %426
    %428 = vrot.lane.b32.xlu0 %v423, 32
    %v429 = vpop.permute.xlu0 %428
    %v432 = vadd.f32 %v412, %v427
    %v433 = vadd.f32 %v413, %v429
    %v434 = vtanh.pop %v432
    %v435 = vtanh.pop %v433
    %438 = vrot.lane.b32.xlu0 %v434, 64
    %v439 = vpop.permute.xlu0 %438
    %440 = vrot.lane.b32.xlu0 %v435, 64
    %v441 = vpop.permute.xlu0 %440
    %v444 = vmul.f32 %v407, %v439
    %v445 = vmul.f32 %v409, %v441
    %vm446 = vcmp.gt.s32.totalorder %v336, 0
    %vm447 = vcmp.gt.s32.totalorder %v337, 0
    %v448 = vsel %vm446, 1, 0
    %v449 = vsel %vm447, 1, 0
    %450 = vset.pattern.permute.xlu0 0
    %451 = vperm.xlu0 %450, %v448
    %v452 = vpop.permute.xlu0 %451
    %453 = vset.pattern.permute.xlu0 0
    %454 = vperm.xlu0 %453, %v449
    %v455 = vpop.permute.xlu0 %454
    %vm456 = vcmp.eq.s32.totalorder %v452, 1
    %vm457 = vcmp.eq.s32.totalorder %v455, 1
    %v458 = vsel %vm456, %v444, 0.0
    %v459 = vsel %vm457, %v445, 0.0
    %v460 = vsel %vm456, %v432, 0.0
    %v461 = vsel %vm457, %v433, 0.0
    %s462 = scalar_lea.vmem [#allocation2], 16
    %v463 = vld [vmem:[%s462] sm:$0xff]
    %v464 = vld [vmem:[%s462 + $0x8] sm:$0xff]
    %v465 = vpack.c.bf16 %v459, %v458
    %467 = vrot.lane.b32.xlu0 %v465, 32
    %v468 = vpop.permute.xlu0 %467
    %v470 = vsel %vm184, %v468, 0
    %472 = vmatprep.subr.bf16.mxu0 0
    %473 = vmatpush1.bf16.msra.mxu0 %v348
    %474 = vmatprep.subr.bf16.mxu0 0
    %475 = vmatpush1.bf16.msra.mxu0 %v349
    %476 = vmatprep.subr.bf16.mxu0 0
    %477 = vmatpush1.bf16.msra.mxu0 0
    %478 = vmatprep.subr.bf16.mxu0 0
    %479 = vmatpush1.bf16.msra.mxu0 0
    %480 = vmatprep.subr.bf16.mxu0 0
    %481 = vmatpush1.bf16.msra.mxu0 0
    %482 = vmatprep.subr.bf16.mxu0 0
    %483 = vmatpush1.bf16.msra.mxu0 0
    %484 = vmatprep.subr.bf16.mxu0 0
    %485 = vmatpush1.bf16.msra.mxu0 0
    %486 = vmatprep.subr.bf16.mxu0 0
    %487 = vmatpush1.bf16.msra.mxu0 0
    %488 = vmatprep.subr.bf16.mxu0 0
    %489 = vmatpush1.bf16.msra.mxu0 0
    %490 = vmatprep.subr.bf16.mxu0 0
    %491 = vmatpush1.bf16.msra.mxu0 0
    %492 = vmatprep.subr.bf16.mxu0 0
    %493 = vmatpush1.bf16.msra.mxu0 0
    %494 = vmatprep.subr.bf16.mxu0 0
    %495 = vmatpush1.bf16.msra.mxu0 0
    %496 = vmatprep.subr.bf16.mxu0 0
    %497 = vmatpush1.bf16.msra.mxu0 0
    %498 = vmatprep.subr.bf16.mxu0 0
    %499 = vmatpush1.bf16.msra.mxu0 0
    %500 = vmatprep.subr.bf16.mxu0 0
    %501 = vmatpush1.bf16.msra.mxu0 0
    %502 = vmatprep.subr.bf16.mxu0 0
    %503 = vmatpush1.bf16.msra.mxu0 0
    %504 = vmatprep.mubr.bf16.mxu0 0
    %505 = vmatmul.mubr.bf16.gmra.mrb[0].mxu0 %v470
    %v506 = vpop.f32.mrb[0].mxu0
    %v507 = vadd.f32 0.0, %v506
    %v508 = vpop.f32.mrb[0].mxu0
    %v509 = vpop.f32.mrb[0].mxu0
    %v510 = vadd.f32 0.0, %v509
    %v511 = vpop.f32.mrb[0].mxu0
    %512 = vdwg.mxu0
    %v513 = vadd.f32 %v463, %v507
    %v514 = vadd.f32 %v464, %v510
    %v515 = vxor.u32 %v513, 2147483648
    %v516 = vxor.u32 %v514, 2147483648
    %v517 = vmul.f32 %v515, 1.442695
    %v518 = vpow.pop %v517
    %v519 = vmul.f32 %v516, 1.442695
    %v520 = vpow.pop %v519
    %v521 = vadd.f32 %v518, 1.0
    %v522 = vadd.f32 %v520, 1.0
    %v523 = vrcp.pop %v521
    %v524 = vmul.f32 1.0, %v523
    %v525 = vrcp.pop %v522
    %v526 = vmul.f32 1.0, %v525
    %v527 = vtanh.pop %v513
    %v528 = vtanh.pop %v514
    %v529 = vmul.f32 %v524, %v460
    %v530 = vmul.f32 %v526, %v461
    %533 = vrot.lane.b32.xlu0 %v527, 64
    %v534 = vpop.permute.xlu0 %533
    %535 = vrot.lane.b32.xlu0 %v528, 64
    %v536 = vpop.permute.xlu0 %535
    %v539 = vmul.f32 %v524, %v534
    %v540 = vmul.f32 %v526, %v536
    %543 = vrot.lane.b32.xlu0 %v539, 32
    %v544 = vpop.permute.xlu0 %543
    %545 = vrot.lane.b32.xlu0 %v540, 32
    %v546 = vpop.permute.xlu0 %545
    %v549 = vadd.f32 %v529, %v544
    %v550 = vadd.f32 %v530, %v546
    %v551 = vtanh.pop %v549
    %v552 = vtanh.pop %v550
    %555 = vrot.lane.b32.xlu0 %v551, 64
    %v556 = vpop.permute.xlu0 %555
    %557 = vrot.lane.b32.xlu0 %v552, 64
    %v558 = vpop.permute.xlu0 %557
    %v561 = vmul.f32 %v524, %v556
    %v562 = vmul.f32 %v526, %v558
    %vm563 = vcmp.gt.s32.totalorder %v336, 1
    %vm564 = vcmp.gt.s32.totalorder %v337, 1
    %v565 = vsel %vm563, 1, 0
    %v566 = vsel %vm564, 1, 0
    %567 = vset.pattern.permute.xlu0 0
    %568 = vperm.xlu0 %567, %v565
    %v569 = vpop.permute.xlu0 %568
    %570 = vset.pattern.permute.xlu0 0
    %571 = vperm.xlu0 %570, %v566
    %v572 = vpop.permute.xlu0 %571
    %vm573 = vcmp.eq.s32.totalorder %v569, 1
    %vm574 = vcmp.eq.s32.totalorder %v572, 1
    %v575 = vsel %vm573, %v561, %v458
    %v576 = vsel %vm574, %v562, %v459
    %v577 = vsel %vm573, %v549, %v460
    %v578 = vsel %vm574, %v550, %v461
    %s579 = scalar_lea.vmem [#allocation2], 32
    %v580 = vld [vmem:[%s579] sm:$0xff]
    %v581 = vld [vmem:[%s579 + $0x8] sm:$0xff]
    %v582 = vpack.c.bf16 %v576, %v575
    %584 = vrot.lane.b32.xlu0 %v582, 32
    %v585 = vpop.permute.xlu0 %584
    %v587 = vsel %vm184, %v585, 0
    %589 = vmatprep.subr.bf16.mxu0 0
    %590 = vmatpush1.bf16.msra.mxu0 %v348
    %591 = vmatprep.subr.bf16.mxu0 0
    %592 = vmatpush1.bf16.msra.mxu0 %v349
    %593 = vmatprep.subr.bf16.mxu0 0
    %594 = vmatpush1.bf16.msra.mxu0 0
    %595 = vmatprep.subr.bf16.mxu0 0
    %596 = vmatpush1.bf16.msra.mxu0 0
    %597 = vmatprep.subr.bf16.mxu0 0
    %598 = vmatpush1.bf16.msra.mxu0 0
    %599 = vmatprep.subr.bf16.mxu0 0
    %600 = vmatpush1.bf16.msra.mxu0 0
    %601 = vmatprep.subr.bf16.mxu0 0
    %602 = vmatpush1.bf16.msra.mxu0 0
    %603 = vmatprep.subr.bf16.mxu0 0
    %604 = vmatpush1.bf16.msra.mxu0 0
    %605 = vmatprep.subr.bf16.mxu0 0
    %606 = vmatpush1.bf16.msra.mxu0 0
    %607 = vmatprep.subr.bf16.mxu0 0
    %608 = vmatpush1.bf16.msra.mxu0 0
    %609 = vmatprep.subr.bf16.mxu0 0
    %610 = vmatpush1.bf16.msra.mxu0 0
    %611 = vmatprep.subr.bf16.mxu0 0
    %612 = vmatpush1.bf16.msra.mxu0 0
    %613 = vmatprep.subr.bf16.mxu0 0
    %614 = vmatpush1.bf16.msra.mxu0 0
    %615 = vmatprep.subr.bf16.mxu0 0
    %616 = vmatpush1.bf16.msra.mxu0 0
    %617 = vmatprep.subr.bf16.mxu0 0
    %618 = vmatpush1.bf16.msra.mxu0 0
    %619 = vmatprep.subr.bf16.mxu0 0
    %620 = vmatpush1.bf16.msra.mxu0 0
    %621 = vmatprep.mubr.bf16.mxu0 0
    %622 = vmatmul.mubr.bf16.gmra.mrb[0].mxu0 %v587
    %v623 = vpop.f32.mrb[0].mxu0
    %v624 = vadd.f32 0.0, %v623
    %v625 = vpop.f32.mrb[0].mxu0
    %v626 = vpop.f32.mrb[0].mxu0
    %v627 = vadd.f32 0.0, %v626
    %v628 = vpop.f32.mrb[0].mxu0
    %629 = vdwg.mxu0
    %v630 = vadd.f32 %v580, %v624
    %v631 = vadd.f32 %v581, %v627
    %v632 = vxor.u32 %v630, 2147483648
    %v633 = vxor.u32 %v631, 2147483648
    %v634 = vmul.f32 %v632, 1.442695
    %v635 = vpow.pop %v634
    %v636 = vmul.f32 %v633, 1.442695
    %v637 = vpow.pop %v636
    %v638 = vadd.f32 %v635, 1.0
    %v639 = vadd.f32 %v637, 1.0
    %v640 = vrcp.pop %v638
    %v641 = vmul.f32 1.0, %v640
    %v642 = vrcp.pop %v639
    %v643 = vmul.f32 1.0, %v642
    %v644 = vtanh.pop %v630
    %v645 = vtanh.pop %v631
    %v646 = vmul.f32 %v641, %v577
    %v647 = vmul.f32 %v643, %v578
    %650 = vrot.lane.b32.xlu0 %v644, 64
    %v651 = vpop.permute.xlu0 %650
    %652 = vrot.lane.b32.xlu0 %v645, 64
    %v653 = vpop.permute.xlu0 %652
    %v656 = vmul.f32 %v641, %v651
    %v657 = vmul.f32 %v643, %v653
    %660 = vrot.lane.b32.xlu0 %v656, 32
    %v661 = vpop.permute.xlu0 %660
    %662 = vrot.lane.b32.xlu0 %v657, 32
    %v663 = vpop.permute.xlu0 %662
    %v666 = vadd.f32 %v646, %v661
    %v667 = vadd.f32 %v647, %v663
    %v668 = vtanh.pop %v666
    %v669 = vtanh.pop %v667
    %672 = vrot.lane.b32.xlu0 %v668, 64
    %v673 = vpop.permute.xlu0 %672
    %674 = vrot.lane.b32.xlu0 %v669, 64
    %v675 = vpop.permute.xlu0 %674
    %v678 = vmul.f32 %v641, %v673
    %v679 = vmul.f32 %v643, %v675
    %vm680 = vcmp.gt.s32.totalorder %v336, 2
    %vm681 = vcmp.gt.s32.totalorder %v337, 2
    %v682 = vsel %vm680, 1, 0
    %v683 = vsel %vm681, 1, 0
    %684 = vset.pattern.permute.xlu0 0
    %685 = vperm.xlu0 %684, %v682
    %v686 = vpop.permute.xlu0 %685
    %687 = vset.pattern.permute.xlu0 0
    %688 = vperm.xlu0 %687, %v683
    %v689 = vpop.permute.xlu0 %688
    %vm690 = vcmp.eq.s32.totalorder %v686, 1
    %vm691 = vcmp.eq.s32.totalorder %v689, 1
    %v692 = vsel %vm690, %v678, %v575
    %v693 = vsel %vm691, %v679, %v576
    %v694 = vsel %vm690, %v666, %v577
    %v695 = vsel %vm691, %v667, %v578
    %s696 = scalar_lea.vmem [#allocation2], 48
    %v697 = vld [vmem:[%s696] sm:$0xff]
    %v698 = vld [vmem:[%s696 + $0x8] sm:$0xff]
    %v699 = vpack.c.bf16 %v693, %v692
    %701 = vrot.lane.b32.xlu0 %v699, 32
    %v702 = vpop.permute.xlu0 %701
    %v704 = vsel %vm184, %v702, 0
    %706 = vmatprep.subr.bf16.mxu0 0
    %707 = vmatpush1.bf16.msra.mxu0 %v348
    %708 = vmatprep.subr.bf16.mxu0 0
    %709 = vmatpush1.bf16.msra.mxu0 %v349
    %710 = vmatprep.subr.bf16.mxu0 0
    %711 = vmatpush1.bf16.msra.mxu0 0
    %712 = vmatprep.subr.bf16.mxu0 0
    %713 = vmatpush1.bf16.msra.mxu0 0
    %714 = vmatprep.subr.bf16.mxu0 0
    %715 = vmatpush1.bf16.msra.mxu0 0
    %716 = vmatprep.subr.bf16.mxu0 0
    %717 = vmatpush1.bf16.msra.mxu0 0
    %718 = vmatprep.subr.bf16.mxu0 0
    %719 = vmatpush1.bf16.msra.mxu0 0
    %720 = vmatprep.subr.bf16.mxu0 0
    %721 = vmatpush1.bf16.msra.mxu0 0
    %722 = vmatprep.subr.bf16.mxu0 0
    %723 = vmatpush1.bf16.msra.mxu0 0
    %724 = vmatprep.subr.bf16.mxu0 0
    %725 = vmatpush1.bf16.msra.mxu0 0
    %726 = vmatprep.subr.bf16.mxu0 0
    %727 = vmatpush1.bf16.msra.mxu0 0
    %728 = vmatprep.subr.bf16.mxu0 0
    %729 = vmatpush1.bf16.msra.mxu0 0
    %730 = vmatprep.subr.bf16.mxu0 0
    %731 = vmatpush1.bf16.msra.mxu0 0
    %732 = vmatprep.subr.bf16.mxu0 0
    %733 = vmatpush1.bf16.msra.mxu0 0
    %734 = vmatprep.subr.bf16.mxu0 0
    %735 = vmatpush1.bf16.msra.mxu0 0
    %736 = vmatprep.subr.bf16.mxu0 0
    %737 = vmatpush1.bf16.msra.mxu0 0
    %738 = vmatprep.mubr.bf16.mxu0 0
    %739 = vmatmul.mubr.bf16.gmra.mrb[0].mxu0 %v704
    %v740 = vpop.f32.mrb[0].mxu0
    %v741 = vadd.f32 0.0, %v740
    %v742 = vpop.f32.mrb[0].mxu0
    %v743 = vpop.f32.mrb[0].mxu0
    %v744 = vadd.f32 0.0, %v743
    %v745 = vpop.f32.mrb[0].mxu0
    %746 = vdwg.mxu0
    %v747 = vadd.f32 %v697, %v741
    %v748 = vadd.f32 %v698, %v744
    %v749 = vxor.u32 %v747, 2147483648
    %v750 = vxor.u32 %v748, 2147483648
    %v751 = vmul.f32 %v749, 1.442695
    %v752 = vpow.pop %v751
    %v753 = vmul.f32 %v750, 1.442695
    %v754 = vpow.pop %v753
    %v755 = vadd.f32 %v752, 1.0
    %v756 = vadd.f32 %v754, 1.0
    %v757 = vrcp.pop %v755
    %v758 = vmul.f32 1.0, %v757
    %v759 = vrcp.pop %v756
    %v760 = vmul.f32 1.0, %v759
    %v761 = vtanh.pop %v747
    %v762 = vtanh.pop %v748
    %v763 = vmul.f32 %v758, %v694
    %v764 = vmul.f32 %v760, %v695
    %767 = vrot.lane.b32.xlu0 %v761, 64
    %v768 = vpop.permute.xlu0 %767
    %769 = vrot.lane.b32.xlu0 %v762, 64
    %v770 = vpop.permute.xlu0 %769
    %v773 = vmul.f32 %v758, %v768
    %v774 = vmul.f32 %v760, %v770
    %777 = vrot.lane.b32.xlu0 %v773, 32
    %v778 = vpop.permute.xlu0 %777
    %779 = vrot.lane.b32.xlu0 %v774, 32
    %v780 = vpop.permute.xlu0 %779
    %v783 = vadd.f32 %v763, %v778
    %v784 = vadd.f32 %v764, %v780
    %v785 = vtanh.pop %v783
    %v786 = vtanh.pop %v784
    %789 = vrot.lane.b32.xlu0 %v785, 64
    %v790 = vpop.permute.xlu0 %789
    %791 = vrot.lane.b32.xlu0 %v786, 64
    %v792 = vpop.permute.xlu0 %791
    %v795 = vmul.f32 %v758, %v790
    %v796 = vmul.f32 %v760, %v792
    %vm797 = vcmp.gt.s32.totalorder %v336, 3
    %vm798 = vcmp.gt.s32.totalorder %v337, 3
    %v799 = vsel %vm797, 1, 0
    %v800 = vsel %vm798, 1, 0
    %801 = vset.pattern.permute.xlu0 0
    %802 = vperm.xlu0 %801, %v799
    %v803 = vpop.permute.xlu0 %802
    %804 = vset.pattern.permute.xlu0 0
    %805 = vperm.xlu0 %804, %v800
    %v806 = vpop.permute.xlu0 %805
    %vm807 = vcmp.eq.s32.totalorder %v803, 1
    %vm808 = vcmp.eq.s32.totalorder %v806, 1
    %v809 = vsel %vm807, %v795, %v692
    %v810 = vsel %vm808, %v796, %v693
    %v811 = vsel %vm807, %v783, %v694
    %v812 = vsel %vm808, %v784, %v695
    %s813 = scalar_lea.vmem [#allocation2], 64
    %v814 = vld [vmem:[%s813] sm:$0xff]
    %v815 = vld [vmem:[%s813 + $0x8] sm:$0xff]
    %v816 = vpack.c.bf16 %v810, %v809
    %818 = vrot.lane.b32.xlu0 %v816, 32
    %v819 = vpop.permute.xlu0 %818
    %v821 = vsel %vm184, %v819, 0
    %823 = vmatprep.subr.bf16.mxu0 0
    %824 = vmatpush1.bf16.msra.mxu0 %v348
    %825 = vmatprep.subr.bf16.mxu0 0
    %826 = vmatpush1.bf16.msra.mxu0 %v349
    %827 = vmatprep.subr.bf16.mxu0 0
    %828 = vmatpush1.bf16.msra.mxu0 0
    %829 = vmatprep.subr.bf16.mxu0 0
    %830 = vmatpush1.bf16.msra.mxu0 0
    %831 = vmatprep.subr.bf16.mxu0 0
    %832 = vmatpush1.bf16.msra.mxu0 0
    %833 = vmatprep.subr.bf16.mxu0 0
    %834 = vmatpush1.bf16.msra.mxu0 0
    %835 = vmatprep.subr.bf16.mxu0 0
    %836 = vmatpush1.bf16.msra.mxu0 0
    %837 = vmatprep.subr.bf16.mxu0 0
    %838 = vmatpush1.bf16.msra.mxu0 0
    %839 = vmatprep.subr.bf16.mxu0 0
    %840 = vmatpush1.bf16.msra.mxu0 0
    %841 = vmatprep.subr.bf16.mxu0 0
    %842 = vmatpush1.bf16.msra.mxu0 0
    %843 = vmatprep.subr.bf16.mxu0 0
    %844 = vmatpush1.bf16.msra.mxu0 0
    %845 = vmatprep.subr.bf16.mxu0 0
    %846 = vmatpush1.bf16.msra.mxu0 0
    %847 = vmatprep.subr.bf16.mxu0 0
    %848 = vmatpush1.bf16.msra.mxu0 0
    %849 = vmatprep.subr.bf16.mxu0 0
    %850 = vmatpush1.bf16.msra.mxu0 0
    %851 = vmatprep.subr.bf16.mxu0 0
    %852 = vmatpush1.bf16.msra.mxu0 0
    %853 = vmatprep.subr.bf16.mxu0 0
    %854 = vmatpush1.bf16.msra.mxu0 0
    %855 = vmatprep.mubr.bf16.mxu0 0
    %856 = vmatmul.mubr.bf16.gmra.mrb[0].mxu0 %v821
    %v857 = vpop.f32.mrb[0].mxu0
    %v858 = vadd.f32 0.0, %v857
    %v859 = vpop.f32.mrb[0].mxu0
    %v860 = vpop.f32.mrb[0].mxu0
    %v861 = vadd.f32 0.0, %v860
    %v862 = vpop.f32.mrb[0].mxu0
    %863 = vdwg.mxu0
    %v864 = vadd.f32 %v814, %v858
    %v865 = vadd.f32 %v815, %v861
    %v866 = vxor.u32 %v864, 2147483648
    %v867 = vxor.u32 %v865, 2147483648
    %v868 = vmul.f32 %v866, 1.442695
    %v869 = vpow.pop %v868
    %v870 = vmul.f32 %v867, 1.442695
    %v871 = vpow.pop %v870
    %v872 = vadd.f32 %v869, 1.0
    %v873 = vadd.f32 %v871, 1.0
    %v874 = vrcp.pop %v872
    %v875 = vmul.f32 1.0, %v874
    %v876 = vrcp.pop %v873
    %v877 = vmul.f32 1.0, %v876
    %v878 = vtanh.pop %v864
    %v879 = vtanh.pop %v865
    %v880 = vmul.f32 %v875, %v811
    %v881 = vmul.f32 %v877, %v812
    %884 = vrot.lane.b32.xlu0 %v878, 64
    %v885 = vpop.permute.xlu0 %884
    %886 = vrot.lane.b32.xlu0 %v879, 64
    %v887 = vpop.permute.xlu0 %886
    %v890 = vmul.f32 %v875, %v885
    %v891 = vmul.f32 %v877, %v887
    %894 = vrot.lane.b32.xlu0 %v890, 32
    %v895 = vpop.permute.xlu0 %894
    %896 = vrot.lane.b32.xlu0 %v891, 32
    %v897 = vpop.permute.xlu0 %896
    %v900 = vadd.f32 %v880, %v895
    %v901 = vadd.f32 %v881, %v897
    %v902 = vtanh.pop %v900
    %v903 = vtanh.pop %v901
    %906 = vrot.lane.b32.xlu0 %v902, 64
    %v907 = vpop.permute.xlu0 %906
    %908 = vrot.lane.b32.xlu0 %v903, 64
    %v909 = vpop.permute.xlu0 %908
    %v912 = vmul.f32 %v875, %v907
    %v913 = vmul.f32 %v877, %v909
    %vm914 = vcmp.gt.s32.totalorder %v336, 4
    %vm915 = vcmp.gt.s32.totalorder %v337, 4
    %v916 = vsel %vm914, 1, 0
    %v917 = vsel %vm915, 1, 0
    %918 = vset.pattern.permute.xlu0 0
    %919 = vperm.xlu0 %918, %v916
    %v920 = vpop.permute.xlu0 %919
    %921 = vset.pattern.permute.xlu0 0
    %922 = vperm.xlu0 %921, %v917
    %v923 = vpop.permute.xlu0 %922
    %vm924 = vcmp.eq.s32.totalorder %v920, 1
    %vm925 = vcmp.eq.s32.totalorder %v923, 1
    %v926 = vsel %vm924, %v912, %v809
    %v927 = vsel %vm925, %v913, %v810
    %v928 = vsel %vm924, %v900, %v811
    %v929 = vsel %vm925, %v901, %v812
    %s930 = scalar_lea.vmem [#allocation2], 80
    %v931 = vld [vmem:[%s930] sm:$0xff]
    %v932 = vld [vmem:[%s930 + $0x8] sm:$0xff]
    %v933 = vpack.c.bf16 %v927, %v926
    %935 = vrot.lane.b32.xlu0 %v933, 32
    %v936 = vpop.permute.xlu0 %935
    %v938 = vsel %vm184, %v936, 0
    %940 = vmatprep.subr.bf16.mxu0 0
    %941 = vmatpush1.bf16.msra.mxu0 %v348
    %942 = vmatprep.subr.bf16.mxu0 0
    %943 = vmatpush1.bf16.msra.mxu0 %v349
    %944 = vmatprep.subr.bf16.mxu0 0
    %945 = vmatpush1.bf16.msra.mxu0 0
    %946 = vmatprep.subr.bf16.mxu0 0
    %947 = vmatpush1.bf16.msra.mxu0 0
    %948 = vmatprep.subr.bf16.mxu0 0
    %949 = vmatpush1.bf16.msra.mxu0 0
    %950 = vmatprep.subr.bf16.mxu0 0
    %951 = vmatpush1.bf16.msra.mxu0 0
    %952 = vmatprep.subr.bf16.mxu0 0
    %953 = vmatpush1.bf16.msra.mxu0 0
    %954 = vmatprep.subr.bf16.mxu0 0
    %955 = vmatpush1.bf16.msra.mxu0 0
    %956 = vmatprep.subr.bf16.mxu0 0
    %957 = vmatpush1.bf16.msra.mxu0 0
    %958 = vmatprep.subr.bf16.mxu0 0
    %959 = vmatpush1.bf16.msra.mxu0 0
    %960 = vmatprep.subr.bf16.mxu0 0
    %961 = vmatpush1.bf16.msra.mxu0 0
    %962 = vmatprep.subr.bf16.mxu0 0
    %963 = vmatpush1.bf16.msra.mxu0 0
    %964 = vmatprep.subr.bf16.mxu0 0
    %965 = vmatpush1.bf16.msra.mxu0 0
    %966 = vmatprep.subr.bf16.mxu0 0
    %967 = vmatpush1.bf16.msra.mxu0 0
    %968 = vmatprep.subr.bf16.mxu0 0
    %969 = vmatpush1.bf16.msra.mxu0 0
    %970 = vmatprep.subr.bf16.mxu0 0
    %971 = vmatpush1.bf16.msra.mxu0 0
    %972 = vmatprep.mubr.bf16.mxu0 0
    %973 = vmatmul.mubr.bf16.gmra.mrb[0].mxu0 %v938
    %v974 = vpop.f32.mrb[0].mxu0
    %v975 = vadd.f32 0.0, %v974
    %v976 = vpop.f32.mrb[0].mxu0
    %v977 = vpop.f32.mrb[0].mxu0
    %v978 = vadd.f32 0.0, %v977
    %v979 = vpop.f32.mrb[0].mxu0
    %980 = vdwg.mxu0
    %v981 = vadd.f32 %v931, %v975
    %v982 = vadd.f32 %v932, %v978
    %v983 = vxor.u32 %v981, 2147483648
    %v984 = vxor.u32 %v982, 2147483648
    %v985 = vmul.f32 %v983, 1.442695
    %v986 = vpow.pop %v985
    %v987 = vmul.f32 %v984, 1.442695
    %v988 = vpow.pop %v987
    %v989 = vadd.f32 %v986, 1.0
    %v990 = vadd.f32 %v988, 1.0
    %v991 = vrcp.pop %v989
    %v992 = vmul.f32 1.0, %v991
    %v993 = vrcp.pop %v990
    %v994 = vmul.f32 1.0, %v993
    %v995 = vtanh.pop %v981
    %v996 = vtanh.pop %v982
    %v997 = vmul.f32 %v992, %v928
    %v998 = vmul.f32 %v994, %v929
    %1001 = vrot.lane.b32.xlu0 %v995, 64
    %v1002 = vpop.permute.xlu0 %1001
    %1003 = vrot.lane.b32.xlu0 %v996, 64
    %v1004 = vpop.permute.xlu0 %1003
    %v1007 = vmul.f32 %v992, %v1002
    %v1008 = vmul.f32 %v994, %v1004
    %1011 = vrot.lane.b32.xlu0 %v1007, 32
    %v1012 = vpop.permute.xlu0 %1011
    %1013 = vrot.lane.b32.xlu0 %v1008, 32
    %v1014 = vpop.permute.xlu0 %1013
    %v1017 = vadd.f32 %v997, %v1012
    %v1018 = vadd.f32 %v998, %v1014
    %v1019 = vtanh.pop %v1017
    %v1020 = vtanh.pop %v1018
    %1023 = vrot.lane.b32.xlu0 %v1019, 64
    %v1024 = vpop.permute.xlu0 %1023
    %1025 = vrot.lane.b32.xlu0 %v1020, 64
    %v1026 = vpop.permute.xlu0 %1025
    %v1029 = vmul.f32 %v992, %v1024
    %v1030 = vmul.f32 %v994, %v1026
    %vm1031 = vcmp.gt.s32.totalorder %v336, 5
    %vm1032 = vcmp.gt.s32.totalorder %v337, 5
    %v1033 = vsel %vm1031, 1, 0
    %v1034 = vsel %vm1032, 1, 0
    %1035 = vset.pattern.permute.xlu0 0
    %1036 = vperm.xlu0 %1035, %v1033
    %v1037 = vpop.permute.xlu0 %1036
    %1038 = vset.pattern.permute.xlu0 0
    %1039 = vperm.xlu0 %1038, %v1034
    %v1040 = vpop.permute.xlu0 %1039
    %vm1041 = vcmp.eq.s32.totalorder %v1037, 1
    %vm1042 = vcmp.eq.s32.totalorder %v1040, 1
    %v1043 = vsel %vm1041, %v1029, %v926
    %v1044 = vsel %vm1042, %v1030, %v927
    %v1045 = vsel %vm1041, %v1017, %v928
    %v1046 = vsel %vm1042, %v1018, %v929
    %s1047 = scalar_lea.vmem [#allocation2], 96
    %v1048 = vld [vmem:[%s1047] sm:$0xff]
    %v1049 = vld [vmem:[%s1047 + $0x8] sm:$0xff]
    %v1050 = vpack.c.bf16 %v1044, %v1043
    %1052 = vrot.lane.b32.xlu0 %v1050, 32
    %v1053 = vpop.permute.xlu0 %1052
    %v1055 = vsel %vm184, %v1053, 0
    %1057 = vmatprep.subr.bf16.mxu0 0
    %1058 = vmatpush1.bf16.msra.mxu0 %v348
    %1059 = vmatprep.subr.bf16.mxu0 0
    %1060 = vmatpush1.bf16.msra.mxu0 %v349
    %1061 = vmatprep.subr.bf16.mxu0 0
    %1062 = vmatpush1.bf16.msra.mxu0 0
    %1063 = vmatprep.subr.bf16.mxu0 0
    %1064 = vmatpush1.bf16.msra.mxu0 0
    %1065 = vmatprep.subr.bf16.mxu0 0
    %1066 = vmatpush1.bf16.msra.mxu0 0
    %1067 = vmatprep.subr.bf16.mxu0 0
    %1068 = vmatpush1.bf16.msra.mxu0 0
    %1069 = vmatprep.subr.bf16.mxu0 0
    %1070 = vmatpush1.bf16.msra.mxu0 0
    %1071 = vmatprep.subr.bf16.mxu0 0
    %1072 = vmatpush1.bf16.msra.mxu0 0
    %1073 = vmatprep.subr.bf16.mxu0 0
    %1074 = vmatpush1.bf16.msra.mxu0 0
    %1075 = vmatprep.subr.bf16.mxu0 0
    %1076 = vmatpush1.bf16.msra.mxu0 0
    %1077 = vmatprep.subr.bf16.mxu0 0
    %1078 = vmatpush1.bf16.msra.mxu0 0
    %1079 = vmatprep.subr.bf16.mxu0 0
    %1080 = vmatpush1.bf16.msra.mxu0 0
    %1081 = vmatprep.subr.bf16.mxu0 0
    %1082 = vmatpush1.bf16.msra.mxu0 0
    %1083 = vmatprep.subr.bf16.mxu0 0
    %1084 = vmatpush1.bf16.msra.mxu0 0
    %1085 = vmatprep.subr.bf16.mxu0 0
    %1086 = vmatpush1.bf16.msra.mxu0 0
    %1087 = vmatprep.subr.bf16.mxu0 0
    %1088 = vmatpush1.bf16.msra.mxu0 0
    %1089 = vmatprep.mubr.bf16.mxu0 0
    %1090 = vmatmul.mubr.bf16.gmra.mrb[0].mxu0 %v1055
    %v1091 = vpop.f32.mrb[0].mxu0
    %v1092 = vadd.f32 0.0, %v1091
    %v1093 = vpop.f32.mrb[0].mxu0
    %v1094 = vpop.f32.mrb[0].mxu0
    %v1095 = vadd.f32 0.0, %v1094
    %v1096 = vpop.f32.mrb[0].mxu0
    %1097 = vdwg.mxu0
    %v1098 = vadd.f32 %v1048, %v1092
    %v1099 = vadd.f32 %v1049, %v1095
    %v1100 = vxor.u32 %v1098, 2147483648
    %v1101 = vxor.u32 %v1099, 2147483648
    %v1102 = vmul.f32 %v1100, 1.442695
    %v1103 = vpow.pop %v1102
    %v1104 = vmul.f32 %v1101, 1.442695
    %v1105 = vpow.pop %v1104
    %v1106 = vadd.f32 %v1103, 1.0
    %v1107 = vadd.f32 %v1105, 1.0
    %v1108 = vrcp.pop %v1106
    %v1109 = vmul.f32 1.0, %v1108
    %v1110 = vrcp.pop %v1107
    %v1111 = vmul.f32 1.0, %v1110
    %v1112 = vtanh.pop %v1098
    %v1113 = vtanh.pop %v1099
    %v1114 = vmul.f32 %v1109, %v1045
    %v1115 = vmul.f32 %v1111, %v1046
    %1118 = vrot.lane.b32.xlu0 %v1112, 64
    %v1119 = vpop.permute.xlu0 %1118
    %1120 = vrot.lane.b32.xlu0 %v1113, 64
    %v1121 = vpop.permute.xlu0 %1120
    %v1124 = vmul.f32 %v1109, %v1119
    %v1125 = vmul.f32 %v1111, %v1121
    %1128 = vrot.lane.b32.xlu0 %v1124, 32
    %v1129 = vpop.permute.xlu0 %1128
    %1130 = vrot.lane.b32.xlu0 %v1125, 32
    %v1131 = vpop.permute.xlu0 %1130
    %v1134 = vadd.f32 %v1114, %v1129
    %v1135 = vadd.f32 %v1115, %v1131
    %v1136 = vtanh.pop %v1134
    %v1137 = vtanh.pop %v1135
    %1140 = vrot.lane.b32.xlu0 %v1136, 64
    %v1141 = vpop.permute.xlu0 %1140
    %1142 = vrot.lane.b32.xlu0 %v1137, 64
    %v1143 = vpop.permute.xlu0 %1142
    %v1146 = vmul.f32 %v1109, %v1141
    %v1147 = vmul.f32 %v1111, %v1143
    %vm1148 = vcmp.gt.s32.totalorder %v336, 6
    %vm1149 = vcmp.gt.s32.totalorder %v337, 6
    %v1150 = vsel %vm1148, 1, 0
    %v1151 = vsel %vm1149, 1, 0
    %1152 = vset.pattern.permute.xlu0 0
    %1153 = vperm.xlu0 %1152, %v1150
    %v1154 = vpop.permute.xlu0 %1153
    %1155 = vset.pattern.permute.xlu0 0
    %1156 = vperm.xlu0 %1155, %v1151
    %v1157 = vpop.permute.xlu0 %1156
    %vm1158 = vcmp.eq.s32.totalorder %v1154, 1
    %vm1159 = vcmp.eq.s32.totalorder %v1157, 1
    %v1160 = vsel %vm1158, %v1146, %v1043
    %v1161 = vsel %vm1159, %v1147, %v1044
    %v1162 = vsel %vm1158, %v1134, %v1045
    %v1163 = vsel %vm1159, %v1135, %v1046
    %s1164 = scalar_lea.vmem [#allocation2], 112
    %v1165 = vld [vmem:[%s1164] sm:$0xff]
    %v1166 = vld [vmem:[%s1164 + $0x8] sm:$0xff]
    %v1167 = vpack.c.bf16 %v1161, %v1160
    %1169 = vrot.lane.b32.xlu0 %v1167, 32
    %v1170 = vpop.permute.xlu0 %1169
    %v1172 = vsel %vm184, %v1170, 0
    %1174 = vmatprep.subr.bf16.mxu0 0
    %1175 = vmatpush1.bf16.msra.mxu0 %v348
    %1176 = vmatprep.subr.bf16.mxu0 0
    %1177 = vmatpush1.bf16.msra.mxu0 %v349
    %1178 = vmatprep.subr.bf16.mxu0 0
    %1179 = vmatpush1.bf16.msra.mxu0 0
    %1180 = vmatprep.subr.bf16.mxu0 0
    %1181 = vmatpush1.bf16.msra.mxu0 0
    %1182 = vmatprep.subr.bf16.mxu0 0
    %1183 = vmatpush1.bf16.msra.mxu0 0
    %1184 = vmatprep.subr.bf16.mxu0 0
    %1185 = vmatpush1.bf16.msra.mxu0 0
    %1186 = vmatprep.subr.bf16.mxu0 0
    %1187 = vmatpush1.bf16.msra.mxu0 0
    %1188 = vmatprep.subr.bf16.mxu0 0
    %1189 = vmatpush1.bf16.msra.mxu0 0
    %1190 = vmatprep.subr.bf16.mxu0 0
    %1191 = vmatpush1.bf16.msra.mxu0 0
    %1192 = vmatprep.subr.bf16.mxu0 0
    %1193 = vmatpush1.bf16.msra.mxu0 0
    %1194 = vmatprep.subr.bf16.mxu0 0
    %1195 = vmatpush1.bf16.msra.mxu0 0
    %1196 = vmatprep.subr.bf16.mxu0 0
    %1197 = vmatpush1.bf16.msra.mxu0 0
    %1198 = vmatprep.subr.bf16.mxu0 0
    %1199 = vmatpush1.bf16.msra.mxu0 0
    %1200 = vmatprep.subr.bf16.mxu0 0
    %1201 = vmatpush1.bf16.msra.mxu0 0
    %1202 = vmatprep.subr.bf16.mxu0 0
    %1203 = vmatpush1.bf16.msra.mxu0 0
    %1204 = vmatprep.subr.bf16.mxu0 0
    %1205 = vmatpush1.bf16.msra.mxu0 0
    %1206 = vmatprep.mubr.bf16.mxu0 0
    %1207 = vmatmul.mubr.bf16.gmra.mrb[0].mxu0 %v1172
    %v1208 = vpop.f32.mrb[0].mxu0
    %v1209 = vadd.f32 0.0, %v1208
    %v1210 = vpop.f32.mrb[0].mxu0
    %v1211 = vpop.f32.mrb[0].mxu0
    %v1212 = vadd.f32 0.0, %v1211
    %v1213 = vpop.f32.mrb[0].mxu0
    %1214 = vdwg.mxu0
    %v1215 = vadd.f32 %v1165, %v1209
    %v1216 = vadd.f32 %v1166, %v1212
    %v1217 = vxor.u32 %v1215, 2147483648
    %v1218 = vxor.u32 %v1216, 2147483648
    %v1219 = vmul.f32 %v1217, 1.442695
    %v1220 = vpow.pop %v1219
    %v1221 = vmul.f32 %v1218, 1.442695
    %v1222 = vpow.pop %v1221
    %v1223 = vadd.f32 %v1220, 1.0
    %v1224 = vadd.f32 %v1222, 1.0
    %v1225 = vrcp.pop %v1223
    %v1226 = vmul.f32 1.0, %v1225
    %v1227 = vrcp.pop %v1224
    %v1228 = vmul.f32 1.0, %v1227
    %v1229 = vtanh.pop %v1215
    %v1230 = vtanh.pop %v1216
    %v1231 = vmul.f32 %v1226, %v1162
    %v1232 = vmul.f32 %v1228, %v1163
    %1235 = vrot.lane.b32.xlu0 %v1229, 64
    %v1236 = vpop.permute.xlu0 %1235
    %1237 = vrot.lane.b32.xlu0 %v1230, 64
    %v1238 = vpop.permute.xlu0 %1237
    %v1241 = vmul.f32 %v1226, %v1236
    %v1242 = vmul.f32 %v1228, %v1238
    %1245 = vrot.lane.b32.xlu0 %v1241, 32
    %v1246 = vpop.permute.xlu0 %1245
    %1247 = vrot.lane.b32.xlu0 %v1242, 32
    %v1248 = vpop.permute.xlu0 %1247
    %v1251 = vadd.f32 %v1231, %v1246
    %v1252 = vadd.f32 %v1232, %v1248
    %v1253 = vtanh.pop %v1251
    %v1254 = vtanh.pop %v1252
    %1257 = vrot.lane.b32.xlu0 %v1253, 64
    %v1258 = vpop.permute.xlu0 %1257
    %1259 = vrot.lane.b32.xlu0 %v1254, 64
    %v1260 = vpop.permute.xlu0 %1259
    %v1263 = vmul.f32 %v1226, %v1258
    %v1264 = vmul.f32 %v1228, %v1260
    %vm1265 = vcmp.gt.s32.totalorder %v336, 7
    %vm1266 = vcmp.gt.s32.totalorder %v337, 7
    %v1267 = vsel %vm1265, 1, 0
    %v1268 = vsel %vm1266, 1, 0
    %1269 = vset.pattern.permute.xlu0 0
    %1270 = vperm.xlu0 %1269, %v1267
    %v1271 = vpop.permute.xlu0 %1270
    %1272 = vset.pattern.permute.xlu0 0
    %1273 = vperm.xlu0 %1272, %v1268
    %v1274 = vpop.permute.xlu0 %1273
    %vm1275 = vcmp.eq.s32.totalorder %v1271, 1
    %vm1276 = vcmp.eq.s32.totalorder %v1274, 1
    %v1277 = vsel %vm1275, %v1263, %v1160
    %v1278 = vsel %vm1276, %v1264, %v1161
    %v1279 = vld [vmem:[#allocation6] sm:$0xff]
    %v1280 = vld [vmem:[#allocation6 + $0x8] sm:$0xff]
    %v1282 = vlaneseq
    %v1283 = vshrl.u32 %v1282, 7
    %v1284 = vsub.s32 0, %v1283
    %v1285 = vrot.slane %v330, %v1284
    %1289 = vrot.lane.b32.xlu0 %v1277, 32
    %v1290 = vpop.permute.xlu0 %1289
    %1291 = vrot.lane.b32.xlu0 %v1278, 32
    %v1292 = vpop.permute.xlu0 %1291
    %v1293 = vsel %vm184, %v1290, 0
    %v1295 = vsel %vm184, %v1292, 0
    %1297 = vmatprep.subr.mxu0 0.0
    %1298 = vmatpush1.msra.mxu0 %v326
    %1299 = vmatprep.subr.mxu0 0.0
    %1300 = vmatpush1.msra.mxu0 %v327
    %1301 = vmatprep.subr.mxu0 0.0
    %1302 = vmatpush1.msra.mxu0 %v328
    %1303 = vmatprep.subr.mxu0 0.0
    %1304 = vmatpush1.msra.mxu0 %v329
    %1305 = vmatprep.subr.mxu0 0.0
    %1306 = vmatpush1.msra.mxu0 0.0
    %1307 = vmatprep.subr.mxu0 0.0
    %1308 = vmatpush1.msra.mxu0 0.0
    %1309 = vmatprep.subr.mxu0 0.0
    %1310 = vmatpush1.msra.mxu0 0.0
    %1311 = vmatprep.subr.mxu0 0.0
    %1312 = vmatpush1.msra.mxu0 0.0
    %1313 = vmatprep.subr.mxu0 0.0
    %1314 = vmatpush1.msra.mxu0 0.0
    %1315 = vmatprep.subr.mxu0 0.0
    %1316 = vmatpush1.msra.mxu0 0.0
    %1317 = vmatprep.subr.mxu0 0.0
    %1318 = vmatpush1.msra.mxu0 0.0
    %1319 = vmatprep.subr.mxu0 0.0
    %1320 = vmatpush1.msra.mxu0 0.0
    %1321 = vmatprep.subr.mxu0 0.0
    %1322 = vmatpush1.msra.mxu0 0.0
    %1323 = vmatprep.subr.mxu0 0.0
    %1324 = vmatpush1.msra.mxu0 0.0
    %1325 = vmatprep.subr.mxu0 0.0
    %1326 = vmatpush1.msra.mxu0 0.0
    %1327 = vmatprep.subr.mxu0 0.0
    %1328 = vmatpush1.msra.mxu0 0.0
    %1329 = vmatprep.subr.mxu0 0.0
    %1330 = vmatpush1.msra.mxu0 0.0
    %1331 = vmatprep.subr.mxu0 0.0
    %1332 = vmatpush1.msra.mxu0 0.0
    %1333 = vmatprep.subr.mxu0 0.0
    %1334 = vmatpush1.msra.mxu0 0.0
    %1335 = vmatprep.subr.mxu0 0.0
    %1336 = vmatpush1.msra.mxu0 0.0
    %1337 = vmatprep.subr.mxu0 0.0
    %1338 = vmatpush1.msra.mxu0 0.0
    %1339 = vmatprep.subr.mxu0 0.0
    %1340 = vmatpush1.msra.mxu0 0.0
    %1341 = vmatprep.subr.mxu0 0.0
    %1342 = vmatpush1.msra.mxu0 0.0
    %1343 = vmatprep.subr.mxu0 0.0
    %1344 = vmatpush1.msra.mxu0 0.0
    %1345 = vmatprep.subr.mxu0 0.0
    %1346 = vmatpush1.msra.mxu0 0.0
    %1347 = vmatprep.subr.mxu0 0.0
    %1348 = vmatpush1.msra.mxu0 0.0
    %1349 = vmatprep.subr.mxu0 0.0
    %1350 = vmatpush1.msra.mxu0 0.0
    %1351 = vmatprep.subr.mxu0 0.0
    %1352 = vmatpush1.msra.mxu0 0.0
    %1353 = vmatprep.subr.mxu0 0.0
    %1354 = vmatpush1.msra.mxu0 0.0
    %1355 = vmatprep.subr.mxu0 0.0
    %1356 = vmatpush1.msra.mxu0 0.0
    %1357 = vmatprep.subr.mxu0 0.0
    %1358 = vmatpush1.msra.mxu0 0.0
    %1359 = vmatprep.subr.mxu0 0.0
    %1360 = vmatpush1.msra.mxu0 0.0
    %1361 = vmatprep.mubr.f32.mxu0 0.0
    %1362 = vmatmul.mubr.f32.gmra.mrb[0].mxu0 %v1293
    %v1363 = vpop.f32.mrb[0].mxu0
    %v1364 = vadd.f32 %v1285, %v1363
    %v1365 = vpop.f32.mrb[0].mxu0
    %1366 = vmatprep.mubr.f32.mxu0 0.0
    %1367 = vmatmul.mubr.f32.gmra.mrb[0].mxu0 %v1295
    %v1368 = vpop.f32.mrb[0].mxu0
    %v1369 = vadd.f32 %v1285, %v1368
    %v1370 = vpop.f32.mrb[0].mxu0
    %1371 = vdwg.mxu0
    %v1373 = vlaneseq
    %v1374 = vshrl.u32 %v1373, 7
    %v1375 = vsub.s32 0, %v1374
    %v1376 = vrot.slane %v335, %v1375
    %v1379 = vsel %vm184, %v1279, 0
    %v1382 = vsel %vm184, %v1280, 0
    %1384 = vmatprep.subr.mxu0 0.0
    %1385 = vmatpush1.msra.mxu0 %v331
    %1386 = vmatprep.subr.mxu0 0.0
    %1387 = vmatpush1.msra.mxu0 %v332
    %1388 = vmatprep.subr.mxu0 0.0
    %1389 = vmatpush1.msra.mxu0 %v333
    %1390 = vmatprep.subr.mxu0 0.0
    %1391 = vmatpush1.msra.mxu0 %v334
    %1392 = vmatprep.subr.mxu0 0.0
    %1393 = vmatpush1.msra.mxu0 0.0
    %1394 = vmatprep.subr.mxu0 0.0
    %1395 = vmatpush1.msra.mxu0 0.0
    %1396 = vmatprep.subr.mxu0 0.0
    %1397 = vmatpush1.msra.mxu0 0.0
    %1398 = vmatprep.subr.mxu0 0.0
    %1399 = vmatpush1.msra.mxu0 0.0
    %1400 = vmatprep.subr.mxu0 0.0
    %1401 = vmatpush1.msra.mxu0 0.0
    %1402 = vmatprep.subr.mxu0 0.0
    %1403 = vmatpush1.msra.mxu0 0.0
    %1404 = vmatprep.subr.mxu0 0.0
    %1405 = vmatpush1.msra.mxu0 0.0
    %1406 = vmatprep.subr.mxu0 0.0
    %1407 = vmatpush1.msra.mxu0 0.0
    %1408 = vmatprep.subr.mxu0 0.0
    %1409 = vmatpush1.msra.mxu0 0.0
    %1410 = vmatprep.subr.mxu0 0.0
    %1411 = vmatpush1.msra.mxu0 0.0
    %1412 = vmatprep.subr.mxu0 0.0
    %1413 = vmatpush1.msra.mxu0 0.0
    %1414 = vmatprep.subr.mxu0 0.0
    %1415 = vmatpush1.msra.mxu0 0.0
    %1416 = vmatprep.subr.mxu0 0.0
    %1417 = vmatpush1.msra.mxu0 0.0
    %1418 = vmatprep.subr.mxu0 0.0
    %1419 = vmatpush1.msra.mxu0 0.0
    %1420 = vmatprep.subr.mxu0 0.0
    %1421 = vmatpush1.msra.mxu0 0.0
    %1422 = vmatprep.subr.mxu0 0.0
    %1423 = vmatpush1.msra.mxu0 0.0
    %1424 = vmatprep.subr.mxu0 0.0
    %1425 = vmatpush1.msra.mxu0 0.0
    %1426 = vmatprep.subr.mxu0 0.0
    %1427 = vmatpush1.msra.mxu0 0.0
    %1428 = vmatprep.subr.mxu0 0.0
    %1429 = vmatpush1.msra.mxu0 0.0
    %1430 = vmatprep.subr.mxu0 0.0
    %1431 = vmatpush1.msra.mxu0 0.0
    %1432 = vmatprep.subr.mxu0 0.0
    %1433 = vmatpush1.msra.mxu0 0.0
    %1434 = vmatprep.subr.mxu0 0.0
    %1435 = vmatpush1.msra.mxu0 0.0
    %1436 = vmatprep.subr.mxu0 0.0
    %1437 = vmatpush1.msra.mxu0 0.0
    %1438 = vmatprep.subr.mxu0 0.0
    %1439 = vmatpush1.msra.mxu0 0.0
    %1440 = vmatprep.subr.mxu0 0.0
    %1441 = vmatpush1.msra.mxu0 0.0
    %1442 = vmatprep.subr.mxu0 0.0
    %1443 = vmatpush1.msra.mxu0 0.0
    %1444 = vmatprep.subr.mxu0 0.0
    %1445 = vmatpush1.msra.mxu0 0.0
    %1446 = vmatprep.subr.mxu0 0.0
    %1447 = vmatpush1.msra.mxu0 0.0
    %1448 = vmatprep.mubr.f32.mxu0 0.0
    %1449 = vmatmul.mubr.f32.gmra.mrb[0].mxu0 %v1379
    %v1450 = vpop.f32.mrb[0].mxu0
    %v1451 = vadd.f32 %v1376, %v1450
    %v1452 = vpop.f32.mrb[0].mxu0
    %1453 = vmatprep.mubr.f32.mxu0 0.0
    %1454 = vmatmul.mubr.f32.gmra.mrb[0].mxu0 %v1382
    %v1455 = vpop.f32.mrb[0].mxu0
    %v1456 = vadd.f32 %v1376, %v1455
    %v1457 = vpop.f32.mrb[0].mxu0
    %1458 = vdwg.mxu0
    %v1459 = vmax.f32 %v1364, %v1451
    %v1460 = vmax.f32 %v1369, %v1456
    %v1461 = vsub.f32 %v1364, %v1459
    %v1462 = vsub.f32 %v1369, %v1460
    %v1463 = vmul.f32 %v1461, 1.442695
    %v1464 = vpow.pop %v1463
    %v1465 = vmul.f32 %v1462, 1.442695
    %v1466 = vpow.pop %v1465
    %v1467 = vsub.f32 %v1451, %v1459
    %v1468 = vsub.f32 %v1456, %v1460
    %v1469 = vmul.f32 %v1467, 1.442695
    %v1470 = vpow.pop %v1469
    %v1471 = vmul.f32 %v1468, 1.442695
    %v1472 = vpow.pop %v1471
    %v1473 = vadd.f32 %v1464, %v1470
    %v1474 = vadd.f32 %v1466, %v1472
    %v1475 = vrcp.pop %v1473
    %v1476 = vrcp.pop %v1474
    %v1477 = vmul.f32 %v1470, %v1475
    %v1478 = vmul.f32 %v1472, %v1476
    %v1481 = vmul.f32 %v1477, %v1290
    %v1482 = vmul.f32 %v1478, %v1292
    %v1483 = vmul.f32 %v1451, %v1279
    %v1484 = vmul.f32 %v1456, %v1280
    %v1485 = vadd.f32 %v1481, %v1483
    %v1486 = vadd.f32 %v1482, %v1484
    %1487 = vst.msk [vmem:[#allocation12] sm:$0xff] %vm184, %v1485
    %1488 = vst.msk [vmem:[#allocation12 + $0x8] sm:$0xff] %vm184, %v1486
    // Predicated region
    $region62: #{tpu_custom_call.1} parent=1 // pred_check
      _
    $region63: #{tpu_custom_call.1} parent=1 // pred_check_branch
      %1490 = sbr.rel (0) target = $region65
    $region64: #{tpu_custom_call.1} parent=1 // pred_region
      %s1492 = ssub.s32 256, 256
      %1493 = vsyncadd [#allocation5], %s1492
      %s1494 = sshll.u32 [#allocation12], 4
      %s1495 = int_to_ptr.vmem [resolvable:$true] %s1494
      %1500 = dma.vmem_to_hbm [thread:$0]  %s1495, 256, %s10, [#allocation5], 128, 128, 8
    $region65: #{tpu_custom_call.1} parent=1 // pred_fallthru
      _
    // Predicated region
    $region66: #{tpu_custom_call.1} parent=1 // pred_check
      _
    $region67: #{tpu_custom_call.1} parent=1 // pred_check_branch
      %1502 = sbr.rel (0) target = $region69
    $region68: #{tpu_custom_call.1} parent=1 // pred_region
      %1503 = dma.done [#allocation5], 256
    $region69: #{tpu_custom_call.1} parent=1 // pred_fallthru
      _
    %1504 = vsyncpa [#allocation4], 1
    %1505 = vsyncpa [#allocation7], 1
    %1506 = vsyncpa [#allocation10], 1
    %1507 = vsyncpa [#allocation5], 1

</llo_original>
